<compile_context>
chip_gen: v6e
topology: v6e:2x2x1
jax: 0.10.0
libtpu: 0.0.40
codegen_flags: <defaults>
</compile_context>

<pallas_src>
import jax
import jax.numpy as jnp
from jax.experimental import pallas as pl
from jax.experimental.pallas import tpu as pltpu


def _round_up(x, m):
    return (x + m - 1) // m * m


def _padded_bytes(rows, cols, itemsize):
    # VMEM allocation granularity is (8, 128) tiles along the last two dims.
    return _round_up(rows, 8) * _round_up(cols, 128) * itemsize


def _vmem_limit_bytes(n_pad, f_node, f_edge, hidden, tile):
    # Double-buffered streamed blocks (edge features + packed indices).
    stream = 2 * (_padded_bytes(tile, f_edge, 2) + _padded_bytes(tile, 2, 4))
    # Per-branch-constant blocks (counted double-buffered as an upper bound).
    const = 2 * (_padded_bytes(n_pad, f_node, 2)
                 + _padded_bytes(f_node, 2 * hidden, 2)
                 + _padded_bytes(1, 2 * hidden, 4)
                 + _padded_bytes(f_edge, hidden, 2)
                 + 3 * _padded_bytes(1, hidden, 4)
                 + _padded_bytes(1, 1, 4))
    scratch = _padded_bytes(n_pad, 2 * hidden, 2) + _padded_bytes(8, hidden, 4)
    # In-body transients: bf16 one-hots, int32 iota/compares, f32 tile results.
    transient = (2 * _padded_bytes(tile, n_pad, 2)
                 + 2 * _padded_bytes(tile, n_pad, 4)
                 + 4 * _padded_bytes(tile, hidden, 4))
    need = stream + const + scratch + transient + (2 << 20)

    try:   # generation-aware cap (v5e/v6e: 128 MiB physical, v7x: 64 MiB)
        phys = int(getattr(pltpu.get_tpu_info(), "vmem_capacity_bytes",
                           64 << 20))
    except Exception:
        phys = 64 << 20
    cap = int(phys * (0.75 if phys >= (100 << 20) else 0.6))
    return int(min(max(2 * need, 16 << 20), cap))


# ----------------------------------------------------------------------------
# Pallas kernel: one (branch, edge-tile) grid step.
# ----------------------------------------------------------------------------
def _agg_kernel(
    nodes_ref,          # [N_pad, F_node] bf16 (ligand rows, then pocket rows)
    edge_ref,           # [1, TILE_E, F_edge] bf16 (this branch / tile)
    idx_ref,            # [1, TILE_E, 2] int32  (col 0 = src-role, col 1 = dst-role)
    w_node2_ref,        # [1, F_node, 2H] bf16  fused src|dst weights
    b_node2_ref,        # [1, 1, 2H] f32
    w_edge_ref,         # [1, F_edge, H] bf16
    b_edge_ref,         # [1, 1, H] f32
    w_fc_ref,           # [1, 1, H] f32         fc weight as a row
    bias_ref,           # [1, 1, 1] f32         E_real * fc bias
    out_ref,            # [1, 1, 1] f32
    proj_ref,           # VMEM [N_pad, 2H] bf16 fused src|dst node projections
    acc_ref,            # VMEM [8, H] f32       sublane-partial accumulator
):
    f32, bf16 = jnp.float32, jnp.bfloat16
    hidden = acc_ref.shape[1]
    n_pad = proj_ref.shape[0]
    tile_e = idx_ref.shape[1]
    e_step = pl.program_id(1)

    # ---- once per branch: project ALL nodes with fused src|dst weights ------
    @pl.when(e_step == 0)
    def _init():
        p2 = jnp.dot(nodes_ref[...], w_node2_ref[0],
                     preferred_element_type=f32) + b_node2_ref[0]   # [N, 2H] f32
        proj_ref[...] = p2.astype(bf16)
        acc_ref[...] = jnp.zeros_like(acc_ref)

    # ---- per edge tile -------------------------------------------------------
    # edge projection (bf16 MXU operands, f32 accumulate, bias in f32)
    e_h = jnp.dot(edge_ref[0], w_edge_ref[0],
                  preferred_element_type=f32) + b_edge_ref[0]       # [T, H] f32

    # gather endpoint node projections via one-hot bf16 MXU matmuls.
    # padded edges carry index -1 -> all-zero one-hot row -> zero contribution.
    # (int32 compare, direct bool->bf16 materialization: no f32 select.)
    idx = idx_ref[0]                                                # [T, 2] i32
    node_ids = jax.lax.broadcasted_iota(jnp.int32, (tile_e, n_pad), 1)
    oh_src = (idx[:, 0:1] == node_ids).astype(bf16)                 # [T, N] bf16
    oh_dst = (idx[:, 1:2] == node_ids).astype(bf16)

    p2 = proj_ref[...]                                              # [N, 2H] bf16
    src_h = jnp.dot(oh_src, p2[:, :hidden], preferred_element_type=f32)
    dst_h = jnp.dot(oh_dst, p2[:, hidden:], preferred_element_type=f32)

    inter = e_h * src_h * dst_h                                     # [T, H] f32
    # sublane-partial sum: pure VPU adds per tile, no per-tile XLU reduce.
    acc_ref[...] += jnp.sum(inter.reshape(tile_e // 8, 8, hidden), axis=0)

    # ---- finalize: sum_e(i @ W + b) == (sum_e i) @ W + E_real*b --------------
    @pl.when(e_step == pl.num_programs(1) - 1)
    def _fin():
        col = jnp.sum(acc_ref[...], axis=0, keepdims=True)          # [1, H] (XLU, once)
        logit = (jnp.sum(col * w_fc_ref[0], axis=1, keepdims=True)
                 + bias_ref[0])                                     # [1, 1]
        out_ref[...] = logit.reshape(1, 1, 1)


# ----------------------------------------------------------------------------
# Wrapper: host-side packing / padding + pallas_call.
# ----------------------------------------------------------------------------
def atom_atom_me_agg(params, ligand_h, pocket_h,
                     e_lp, src_lp, dst_lp,
                     e_pl, src_pl, dst_pl,
                     *, tile_e=1024):
    """Forward pass of AtomAtomMeAggLayer for a single heterograph.

    Returns (logit_lp, logit_pl), each of shape (1, 1) (dgl.sum_edges with a
    batch of one graph).
    """
    f32, bf16, i32 = jnp.float32, jnp.bfloat16, jnp.int32
    n_l, f_node = ligand_h.shape
    n_p = pocket_h.shape[0]
    e_lp_n, f_edge = e_lp.shape
    e_pl_n = e_pl.shape[0]
    hidden = params["w_lp_src"].shape[1]

    # ---- nodes: ligand rows then pocket rows, bf16, padded to sublane mult. --
    n_tot = n_l + n_p
    n_pad = _round_up(n_tot, 8)
    nodes = (jnp.zeros((n_pad, f_node), f32)
             .at[:n_l].set(ligand_h)
             .at[n_l:n_tot].set(pocket_h)
             .astype(bf16))

    # ---- edge tiling / padding (both branches padded to a common E_pad) ------
    e_max = max(e_lp_n, e_pl_n, 1)
    tile = max(8, min(_round_up(tile_e, 8), _round_up(e_max, 8)))
    e_pad = _round_up(e_max, tile)
    num_tiles = e_pad // tile

    def pad_edges(e):
        return jnp.zeros((e_pad, f_edge), f32).at[:e.shape[0]].set(e).astype(bf16)

    def pad_idx_pair(lig_idx, pok_idx):
        # col 0: ligand ("src-role") id; col 1: pocket id offset by n_l into
        # the packed node array; padding rows carry -1 (never matched).
        out = jnp.full((e_pad, 2), -1, i32)
        out = out.at[:lig_idx.shape[0], 0].set(lig_idx.astype(i32))
        out = out.at[:pok_idx.shape[0], 1].set(pok_idx.astype(i32) + n_l)
        return out

    # Branch 0 = inter_l2p (edge src = ligand via prj_lp_src, dst = pocket via
    # prj_lp_dst).  Branch 1 = inter_p2l (edge dst = ligand via prj_pl_src,
    # edge src = pocket via prj_pl_dst).
    edges = jnp.stack([pad_edges(e_lp), pad_edges(e_pl)])             # [2,E,Fe] bf16
    idx = jnp.stack([pad_idx_pair(src_lp, dst_lp),
                     pad_idx_pair(dst_pl, src_pl)])                   # [2,E,2] i32

    # ---- per-branch packed weights (MXU operands pre-cast to bf16) -----------
    w_node2 = jnp.stack([
        jnp.concatenate([params["w_lp_src"], params["w_lp_dst"]], axis=1),
        jnp.concatenate([params["w_pl_src"], params["w_pl_dst"]], axis=1),
    ]).astype(bf16)                                                   # [2,Fn,2H]
    b_node2 = jnp.stack([
        jnp.concatenate([params["b_lp_src"], params["b_lp_dst"]], axis=1),
        jnp.concatenate([params["b_pl_src"], params["b_pl_dst"]], axis=1)])  # [2,1,2H]
    w_edge = jnp.stack([params["w_lp_e"], params["w_pl_e"]]).astype(bf16)    # [2,Fe,H]
    b_edge = jnp.stack([params["b_lp_e"], params["b_pl_e"]])                 # [2,1,H]
    w_fc = jnp.stack([params["w_fc_lp"].T, params["w_fc_pl"].T])             # [2,1,H]
    bias_term = jnp.stack([e_lp_n * params["b_fc_lp"],
                           e_pl_n * params["b_fc_pl"]])                      # [2,1,1]

    vmem_limit = _vmem_limit_bytes(n_pad, f_node, f_edge, hidden, tile)

    # TODO(synk): for N_pad beyond a few thousand, tile the one-hot gather over
    # node chunks (or DMA row-gather with scalar-prefetched indices and pl.ANY
    # node projections) — the [TILE_E, N_pad] one-hot cost grows with N_pad.
    def run(single_buffer_consts):
        if single_buffer_consts:
            def const_spec(shape, imap):
                return pl.BlockSpec(shape, imap, pipeline_mode=pl.Buffered(1))
        else:
            const_spec = pl.BlockSpec

        in_specs = [
            const_spec((n_pad, f_node), lambda b, e: (0, 0)),              # nodes
            pl.BlockSpec((1, tile, f_edge), lambda b, e: (b, e, 0)),       # edges
            pl.BlockSpec((1, tile, 2), lambda b, e: (b, e, 0)),            # packed idx
            const_spec((1, f_node, 2 * hidden), lambda b, e: (b, 0, 0)),   # w_node2
            const_spec((1, 1, 2 * hidden), lambda b, e: (b, 0, 0)),        # b_node2
            const_spec((1, f_edge, hidden), lambda b, e: (b, 0, 0)),       # w_edge
            const_spec((1, 1, hidden), lambda b, e: (b, 0, 0)),            # b_edge
            const_spec((1, 1, hidden), lambda b, e: (b, 0, 0)),            # w_fc
            const_spec((1, 1, 1), lambda b, e: (b, 0, 0)),                 # E*b_fc
        ]
        return pl.pallas_call(
            _agg_kernel,
            out_shape=jax.ShapeDtypeStruct((2, 1, 1), f32),
            grid_spec=pltpu.PrefetchScalarGridSpec(
                num_scalar_prefetch=0,
                grid=(2, num_tiles),                        # (branch, edge tile)
                in_specs=in_specs,
                out_specs=pl.BlockSpec((1, 1, 1), lambda b, e: (b, 0, 0)),
                scratch_shapes=[
                    pltpu.VMEM((n_pad, 2 * hidden), jnp.bfloat16),  # fused proj
                    pltpu.VMEM((8, hidden), jnp.float32),           # partial acc
                ],
            ),
            compiler_params=pltpu.CompilerParams(
                dimension_semantics=("parallel", "arbitrary"),      # megacore on v7x
                vmem_limit_bytes=vmem_limit,
            ),
        )(nodes, edges, idx, w_node2, b_node2, w_edge, b_edge, w_fc, bias_term)

    try:
        out = run(True)
    except Exception:
        # pl.Buffered(1) unsupported on this jax/libtpu -> default buffering.
        out = run(False)

    return out[0], out[1]        # each (1, 1)


# ----------------------------------------------------------------------------
# Deterministic parameter init (PyTorch nn.Linear-style uniform fan-in init),
# weights stored as [in_features, out_features].
# ----------------------------------------------------------------------------
def init_params(key, node_feat, edge_feat, hidden_feat):
    names_and_shapes = [
        ("lp_src", node_feat, hidden_feat),
        ("lp_dst", node_feat, hidden_feat),
        ("lp_e", edge_feat, hidden_feat),
        ("fc_lp", hidden_feat, 1),
        ("pl_src", node_feat, hidden_feat),
        ("pl_dst", node_feat, hidden_feat),
        ("pl_e", edge_feat, hidden_feat),
        ("fc_pl", hidden_feat, 1),
    ]
    params = {}
    for name, fin, fout in names_and_shapes:
        key, kw, kb = jax.random.split(key, 3)
        bound = 1.0 / jnp.sqrt(jnp.float32(fin))
        params[f"w_{name}"] = jax.random.uniform(
            kw, (fin, fout), jnp.float32, -bound, bound)
        params[f"b_{name}"] = jax.random.uniform(
            kb, (1, fout), jnp.float32, -bound, bound)
    return params


# ----------------------------------------------------------------------------
# Pure-JAX reference (mirrors the DGL semantics; emulates the kernel's bf16
# matmul inputs and bf16 node-projection storage so tolerances stay tight).
# ----------------------------------------------------------------------------
def reference(params, ligand_h, pocket_h, e_lp, src_lp, dst_lp,
              e_pl, src_pl, dst_pl):
    f32, bf = jnp.float32, jnp.bfloat16

    def lin(x, w, b):
        return jnp.dot(x.astype(bf), w.astype(bf),
                       preferred_element_type=f32) + b

    def rnd(x):                       # bf16 storage of node projections
        return x.astype(bf).astype(f32)

    def branch(w_lig, b_lig, w_pok, b_pok, w_e, b_e, w_fc, b_fc,
               e_feat, lig_idx, pok_idx):
        lig_p = rnd(lin(ligand_h, w_lig, b_lig))
        pok_p = rnd(lin(pocket_h, w_pok, b_pok))
        e_p = lin(e_feat, w_e, b_e)
        inter = e_p * lig_p[lig_idx] * pok_p[pok_idx]
        s = jnp.sum(inter, axis=0, keepdims=True)
        return (jnp.sum(s * w_fc.T, axis=1, keepdims=True)
                + e_feat.shape[0] * b_fc)

    # inter_l2p: edges.src = ligand (prj_lp_src), edges.dst = pocket (prj_lp_dst)
    logit_lp = branch(params["w_lp_src"], params["b_lp_src"],
                      params["w_lp_dst"], params["b_lp_dst"],
                      params["w_lp_e"], params["b_lp_e"],
                      params["w_fc_lp"], params["b_fc_lp"],
                      e_lp, src_lp, dst_lp)
    # inter_p2l: edges.src = pocket (prj_pl_dst), edges.dst = ligand (prj_pl_src)
    logit_pl = branch(params["w_pl_src"], params["b_pl_src"],
                      params["w_pl_dst"], params["b_pl_dst"],
                      params["w_pl_e"], params["b_pl_e"],
                      params["w_fc_pl"], params["b_fc_pl"],
                      e_pl, dst_pl, src_pl)
    return logit_lp, logit_pl


if __name__ == "__main__":
    NODE_FEAT, EDGE_FEAT, HIDDEN = 16, 8, 32
    N_LIGAND, N_POCKET = 7, 6          # exercises node padding (13 -> 16)
    E_LP, E_PL = 24, 16                # exercises ragged-edge masking

    key = jax.random.PRNGKey(0)
    key, k_params, k1, k2, k3, k4, k5, k6, k7, k8 = jax.random.split(key, 10)

    params = init_params(k_params, NODE_FEAT, EDGE_FEAT, HIDDEN)

    ligand_h = jax.random.normal(k1, (N_LIGAND, NODE_FEAT), jnp.float32)
    pocket_h = jax.random.normal(k2, (N_POCKET, NODE_FEAT), jnp.float32)
    e_lp = jax.random.normal(k3, (E_LP, EDGE_FEAT), jnp.float32)
    e_pl = jax.random.normal(k4, (E_PL, EDGE_FEAT), jnp.float32)
    src_lp = jax.random.randint(k5, (E_LP,), 0, N_LIGAND)   # ligand ids
    dst_lp = jax.random.randint(k6, (E_LP,), 0, N_POCKET)   # pocket ids
    src_pl = jax.random.randint(k7, (E_PL,), 0, N_POCKET)   # pocket ids
    dst_pl = jax.random.randint(k8, (E_PL,), 0, N_LIGAND)   # ligand ids

    # tile_e=8 at these toy sizes so the edge grid axis actually iterates
    # (3 tiles for the l2p branch, masked padding for the p2l branch).
    out_lp, out_pl = atom_atom_me_agg(
        params, ligand_h, pocket_h, e_lp, src_lp, dst_lp,
        e_pl, src_pl, dst_pl, tile_e=8)
    jax.block_until_ready((out_lp, out_pl))

    ref_lp, ref_pl = reference(
        params, ligand_h, pocket_h, e_lp, src_lp, dst_lp, e_pl, src_pl, dst_pl)

    assert out_lp.shape == (1, 1) and out_pl.shape == (1, 1)
    # bf16 matmul inputs -> compare against the bf16-matched reference with a
    # tolerance that still catches any wiring / gather / masking error.
    assert jnp.allclose(out_lp, ref_lp, rtol=2e-2, atol=2e-2), (out_lp, ref_lp)
    assert jnp.allclose(out_pl, ref_pl, rtol=2e-2, atol=2e-2), (out_pl, ref_pl)

    # TODO(synk): batch multiple heterographs per pallas_call (graph grid axis
    # + scalar-prefetched per-graph edge offsets) to amortize launch cost at
    # production scale.
    print("KERNEL_OK")
</pallas_src>

<mosaic_0001>
module attributes {stable_mosaic.version = 11 : i64} {
  func.func @_agg_kernel(%arg0: i32, %arg1: i32, %arg2: memref<16x16xbf16, #tpu.memory_space<vmem>>, %arg3: memref<1x8x8xbf16, #tpu.memory_space<vmem>>, %arg4: memref<1x8x2xi32, #tpu.memory_space<vmem>>, %arg5: memref<1x16x64xbf16, #tpu.memory_space<vmem>>, %arg6: memref<1x1x64xf32, #tpu.memory_space<vmem>>, %arg7: memref<1x8x32xbf16, #tpu.memory_space<vmem>>, %arg8: memref<1x1x32xf32, #tpu.memory_space<vmem>>, %arg9: memref<1x1x32xf32, #tpu.memory_space<vmem>>, %arg10: memref<1x1x1xf32, #tpu.memory_space<vmem>>, %arg11: memref<1x1x1xf32, #tpu.memory_space<vmem>>, %arg12: memref<16x64xbf16, #tpu.memory_space<vmem>>, %arg13: memref<8x32xf32, #tpu.memory_space<vmem>>) attributes {dimension_semantics = [#tpu.dimension_semantics<parallel>, #tpu.dimension_semantics<arbitrary>], iteration_bounds = array<i64: 2, 3>, scalar_prefetch = 0 : i64, scratch_operands = 2 : i64, tpu.core_type = #tpu.core_type<tc>, window_params = [{pipeline_mode = #tpu.pipeline_mode<synchronous>, transform_indices = @transform_0, window_bounds = array<i64: 16, 16>}, {transform_indices = @transform_1, window_bounds = array<i64: 1, 8, 8>}, {transform_indices = @transform_2, window_bounds = array<i64: 1, 8, 2>}, {pipeline_mode = #tpu.pipeline_mode<synchronous>, transform_indices = @transform_3, window_bounds = array<i64: 1, 16, 64>}, {pipeline_mode = #tpu.pipeline_mode<synchronous>, transform_indices = @transform_4, window_bounds = array<i64: 1, 1, 64>}, {pipeline_mode = #tpu.pipeline_mode<synchronous>, transform_indices = @transform_5, window_bounds = array<i64: 1, 8, 32>}, {pipeline_mode = #tpu.pipeline_mode<synchronous>, transform_indices = @transform_6, window_bounds = array<i64: 1, 1, 32>}, {pipeline_mode = #tpu.pipeline_mode<synchronous>, transform_indices = @transform_7, window_bounds = array<i64: 1, 1, 32>}, {pipeline_mode = #tpu.pipeline_mode<synchronous>, transform_indices = @transform_8, window_bounds = array<i64: 1, 1, 1>}, {transform_indices = @transform_9, window_bounds = array<i64: 1, 1, 1>}]} {
    %c0_i32 = arith.constant 0 : i32
    %0 = arith.cmpi eq, %arg1, %c0_i32 : i32
    %1 = arith.extui %0 : i1 to i32
    %c0_i32_0 = arith.constant 0 : i32
    %2 = arith.cmpi ne, %1, %c0_i32_0 : i32
    scf.if %2 {
      %c0_22 = arith.constant 0 : index
      %c0_23 = arith.constant 0 : index
      %42 = vector.load %arg2[%c0_22, %c0_23] : memref<16x16xbf16, #tpu.memory_space<vmem>>, vector<16x16xbf16>
      %c0_24 = arith.constant 0 : index
      %c0_25 = arith.constant 0 : index
      %c0_26 = arith.constant 0 : index
      %43 = vector.load %arg5[%c0_24, %c0_25, %c0_26] : memref<1x16x64xbf16, #tpu.memory_space<vmem>>, vector<1x16x64xbf16>
      %44 = vector.shape_cast %43 : vector<1x16x64xbf16> to vector<16x64xbf16>
      %cst_27 = arith.constant dense<0.000000e+00> : vector<16x64xf32>
      %45 = tpu.matmul %42, %44, %cst_27 {dimension_numbers = #tpu.dot_dimension_numbers<[1], [0], [0], [1], [0, 0, 1, 1], [], []>} : vector<16x16xbf16>, vector<16x64xbf16>, vector<16x64xf32> -> vector<16x64xf32>
      %c0_28 = arith.constant 0 : index
      %c0_29 = arith.constant 0 : index
      %c0_30 = arith.constant 0 : index
      %46 = vector.load %arg6[%c0_28, %c0_29, %c0_30] : memref<1x1x64xf32, #tpu.memory_space<vmem>>, vector<1x1x64xf32>
      %47 = vector.shape_cast %46 : vector<1x1x64xf32> to vector<1x64xf32>
      %48 = vector.broadcast %47 : vector<1x64xf32> to vector<16x64xf32>
      %49 = arith.addf %45, %48 : vector<16x64xf32>
      %50 = arith.truncf %49 : vector<16x64xf32> to vector<16x64xbf16>
      %c0_31 = arith.constant 0 : index
      %c0_32 = arith.constant 0 : index
      %51 = vector.load %arg12[%c0_31, %c0_32] : memref<16x64xbf16, #tpu.memory_space<vmem>>, vector<16x64xbf16>
      tpu.vector_store %arg12[%c0_31, %c0_32], %50 {strides = array<i32>} : memref<16x64xbf16, #tpu.memory_space<vmem>>, vector<16x64xbf16>,
      %cst_33 = arith.constant 0.000000e+00 : f32
      %52 = vector.broadcast %cst_33 : f32 to vector<8x32xf32>
      %c0_34 = arith.constant 0 : index
      %c0_35 = arith.constant 0 : index
      %53 = vector.load %arg13[%c0_34, %c0_35] : memref<8x32xf32, #tpu.memory_space<vmem>>, vector<8x32xf32>
      tpu.vector_store %arg13[%c0_34, %c0_35], %52 {strides = array<i32>} : memref<8x32xf32, #tpu.memory_space<vmem>>, vector<8x32xf32>,
    } else {
    }
    %c0 = arith.constant 0 : index
    %c0_1 = arith.constant 0 : index
    %c0_2 = arith.constant 0 : index
    %3 = vector.load %arg3[%c0, %c0_1, %c0_2] : memref<1x8x8xbf16, #tpu.memory_space<vmem>>, vector<1x8x8xbf16>
    %4 = vector.shape_cast %3 : vector<1x8x8xbf16> to vector<8x8xbf16>
    %c0_3 = arith.constant 0 : index
    %c0_4 = arith.constant 0 : index
    %c0_5 = arith.constant 0 : index
    %5 = vector.load %arg7[%c0_3, %c0_4, %c0_5] : memref<1x8x32xbf16, #tpu.memory_space<vmem>>, vector<1x8x32xbf16>
    %6 = vector.shape_cast %5 : vector<1x8x32xbf16> to vector<8x32xbf16>
    %cst = arith.constant dense<0.000000e+00> : vector<8x32xf32>
    %7 = tpu.matmul %4, %6, %cst {dimension_numbers = #tpu.dot_dimension_numbers<[1], [0], [0], [1], [0, 0, 1, 1], [], []>} : vector<8x8xbf16>, vector<8x32xbf16>, vector<8x32xf32> -> vector<8x32xf32>
    %c0_6 = arith.constant 0 : index
    %c0_7 = arith.constant 0 : index
    %c0_8 = arith.constant 0 : index
    %8 = vector.load %arg8[%c0_6, %c0_7, %c0_8] : memref<1x1x32xf32, #tpu.memory_space<vmem>>, vector<1x1x32xf32>
    %9 = vector.shape_cast %8 : vector<1x1x32xf32> to vector<1x32xf32>
    %10 = vector.broadcast %9 : vector<1x32xf32> to vector<8x32xf32>
    %11 = arith.addf %7, %10 : vector<8x32xf32>
    %c0_9 = arith.constant 0 : index
    %c0_10 = arith.constant 0 : index
    %c0_11 = arith.constant 0 : index
    %12 = vector.load %arg4[%c0_9, %c0_10, %c0_11] : memref<1x8x2xi32, #tpu.memory_space<vmem>>, vector<1x8x2xi32>
    %13 = vector.shape_cast %12 : vector<1x8x2xi32> to vector<8x2xi32>
    %14 = tpu.iota {dimensions = array<i32: 1>} : vector<8x16xi32>
    %15 = vector.extract_strided_slice %13 {offsets = [0, 0], sizes = [8, 1], strides = [1, 1]} : vector<8x2xi32> to vector<8x1xi32>
    %16 = vector.broadcast %15 : vector<8x1xi32> to vector<8x16xi32>
    %17 = arith.cmpi eq, %16, %14 : vector<8x16xi32>
    %18 = arith.extui %17 : vector<8x16xi1> to vector<8x16xi32>
    %19 = arith.sitofp %18 : vector<8x16xi32> to vector<8x16xf32>
    %20 = arith.truncf %19 : vector<8x16xf32> to vector<8x16xbf16>
    %21 = vector.extract_strided_slice %13 {offsets = [0, 1], sizes = [8, 1], strides = [1, 1]} : vector<8x2xi32> to vector<8x1xi32>
    %22 = vector.broadcast %21 : vector<8x1xi32> to vector<8x16xi32>
    %23 = arith.cmpi eq, %22, %14 : vector<8x16xi32>
    %24 = arith.extui %23 : vector<8x16xi1> to vector<8x16xi32>
    %25 = arith.sitofp %24 : vector<8x16xi32> to vector<8x16xf32>
    %26 = arith.truncf %25 : vector<8x16xf32> to vector<8x16xbf16>
    %c0_12 = arith.constant 0 : index
    %c0_13 = arith.constant 0 : index
    %27 = vector.load %arg12[%c0_12, %c0_13] : memref<16x64xbf16, #tpu.memory_space<vmem>>, vector<16x64xbf16>
    %28 = vector.extract_strided_slice %27 {offsets = [0, 0], sizes = [16, 32], strides = [1, 1]} : vector<16x64xbf16> to vector<16x32xbf16>
    %cst_14 = arith.constant dense<0.000000e+00> : vector<8x32xf32>
    %29 = tpu.matmul %20, %28, %cst_14 {dimension_numbers = #tpu.dot_dimension_numbers<[1], [0], [0], [1], [0, 0, 1, 1], [], []>} : vector<8x16xbf16>, vector<16x32xbf16>, vector<8x32xf32> -> vector<8x32xf32>
    %30 = vector.extract_strided_slice %27 {offsets = [0, 32], sizes = [16, 32], strides = [1, 1]} : vector<16x64xbf16> to vector<16x32xbf16>
    %cst_15 = arith.constant dense<0.000000e+00> : vector<8x32xf32>
    %31 = tpu.matmul %26, %30, %cst_15 {dimension_numbers = #tpu.dot_dimension_numbers<[1], [0], [0], [1], [0, 0, 1, 1], [], []>} : vector<8x16xbf16>, vector<16x32xbf16>, vector<8x32xf32> -> vector<8x32xf32>
    %32 = arith.mulf %11, %29 : vector<8x32xf32>
    %33 = arith.mulf %32, %31 : vector<8x32xf32>
    %c0_16 = arith.constant 0 : index
    %c0_17 = arith.constant 0 : index
    %34 = vector.load %arg13[%c0_16, %c0_17] : memref<8x32xf32, #tpu.memory_space<vmem>>, vector<8x32xf32>
    %35 = vector.shape_cast %33 : vector<8x32xf32> to vector<1x8x32xf32>
    %cst_18 = arith.constant dense<0.000000e+00> : vector<8x32xf32>
    %36 = vector.multi_reduction <add>, %35, %cst_18 [0] : vector<1x8x32xf32> to vector<8x32xf32>
    %37 = arith.addf %34, %36 : vector<8x32xf32>
    %c0_19 = arith.constant 0 : index
    %c0_20 = arith.constant 0 : index
    %38 = vector.load %arg13[%c0_19, %c0_20] : memref<8x32xf32, #tpu.memory_space<vmem>>, vector<8x32xf32>
    tpu.vector_store %arg13[%c0_19, %c0_20], %37 {strides = array<i32>} : memref<8x32xf32, #tpu.memory_space<vmem>>, vector<8x32xf32>,
    %c2_i32 = arith.constant 2 : i32
    %39 = arith.cmpi eq, %arg1, %c2_i32 : i32
    %40 = arith.extui %39 : i1 to i32
    %c0_i32_21 = arith.constant 0 : i32
    %41 = arith.cmpi ne, %40, %c0_i32_21 : i32
    scf.if %41 {
      %c0_22 = arith.constant 0 : index
      %c0_23 = arith.constant 0 : index
      %42 = vector.load %arg13[%c0_22, %c0_23] : memref<8x32xf32, #tpu.memory_space<vmem>>, vector<8x32xf32>
      %cst_24 = arith.constant dense<0.000000e+00> : vector<32xf32>
      %43 = vector.multi_reduction <add>, %42, %cst_24 [0] : vector<8x32xf32> to vector<32xf32>
      %44 = vector.shape_cast %43 : vector<32xf32> to vector<1x32xf32>
      %c0_25 = arith.constant 0 : index
      %c0_26 = arith.constant 0 : index
      %c0_27 = arith.constant 0 : index
      %45 = vector.load %arg9[%c0_25, %c0_26, %c0_27] : memref<1x1x32xf32, #tpu.memory_space<vmem>>, vector<1x1x32xf32>
      %46 = vector.shape_cast %45 : vector<1x1x32xf32> to vector<1x32xf32>
      %47 = arith.mulf %44, %46 : vector<1x32xf32>
      %cst_28 = arith.constant dense<0.000000e+00> : vector<1xf32>
      %48 = vector.multi_reduction <add>, %47, %cst_28 [1] : vector<1x32xf32> to vector<1xf32>
      %49 = vector.shape_cast %48 : vector<1xf32> to vector<1x1xf32>
      %c0_29 = arith.constant 0 : index
      %c0_30 = arith.constant 0 : index
      %c0_31 = arith.constant 0 : index
      %50 = vector.load %arg10[%c0_29, %c0_30, %c0_31] : memref<1x1x1xf32, #tpu.memory_space<vmem>>, vector<1x1x1xf32>
      %51 = vector.shape_cast %50 : vector<1x1x1xf32> to vector<1x1xf32>
      %52 = arith.addf %49, %51 : vector<1x1xf32>
      %53 = vector.shape_cast %52 : vector<1x1xf32> to vector<1x1x1xf32>
      %c0_32 = arith.constant 0 : index
      %c0_33 = arith.constant 0 : index
      %c0_34 = arith.constant 0 : index
      %54 = vector.load %arg11[%c0_32, %c0_33, %c0_34] : memref<1x1x1xf32, #tpu.memory_space<vmem>>, vector<1x1x1xf32>
      tpu.vector_store %arg11[%c0_32, %c0_33, %c0_34], %53 {strides = array<i32>} : memref<1x1x1xf32, #tpu.memory_space<vmem>>, vector<1x1x1xf32>,
    } else {
    }
    return
  }
  func.func @transform_0(%arg0: i32, %arg1: i32) -> (i32, i32) {
    %c0_i32 = arith.constant 0 : i32
    %c0_i32_0 = arith.constant 0 : i32
    %c0_i32_1 = arith.constant 0 : i32
    return %c0_i32, %c0_i32_0 : i32, i32
  }
  func.func @transform_1(%arg0: i32, %arg1: i32) -> (i32, i32, i32) {
    %c0_i32 = arith.constant 0 : i32
    %c0_i32_0 = arith.constant 0 : i32
    return %arg0, %arg1, %c0_i32 : i32, i32, i32
  }
  func.func @transform_2(%arg0: i32, %arg1: i32) -> (i32, i32, i32) {
    %c0_i32 = arith.constant 0 : i32
    %c0_i32_0 = arith.constant 0 : i32
    return %arg0, %arg1, %c0_i32 : i32, i32, i32
  }
  func.func @transform_3(%arg0: i32, %arg1: i32) -> (i32, i32, i32) {
    %c0_i32 = arith.constant 0 : i32
    %c0_i32_0 = arith.constant 0 : i32
    %c0_i32_1 = arith.constant 0 : i32
    return %arg0, %c0_i32, %c0_i32_0 : i32, i32, i32
  }
  func.func @transform_4(%arg0: i32, %arg1: i32) -> (i32, i32, i32) {
    %c0_i32 = arith.constant 0 : i32
    %c0_i32_0 = arith.constant 0 : i32
    %c0_i32_1 = arith.constant 0 : i32
    return %arg0, %c0_i32, %c0_i32_0 : i32, i32, i32
  }
  func.func @transform_5(%arg0: i32, %arg1: i32) -> (i32, i32, i32) {
    %c0_i32 = arith.constant 0 : i32
    %c0_i32_0 = arith.constant 0 : i32
    %c0_i32_1 = arith.constant 0 : i32
    return %arg0, %c0_i32, %c0_i32_0 : i32, i32, i32
  }
  func.func @transform_6(%arg0: i32, %arg1: i32) -> (i32, i32, i32) {
    %c0_i32 = arith.constant 0 : i32
    %c0_i32_0 = arith.constant 0 : i32
    %c0_i32_1 = arith.constant 0 : i32
    return %arg0, %c0_i32, %c0_i32_0 : i32, i32, i32
  }
  func.func @transform_7(%arg0: i32, %arg1: i32) -> (i32, i32, i32) {
    %c0_i32 = arith.constant 0 : i32
    %c0_i32_0 = arith.constant 0 : i32
    %c0_i32_1 = arith.constant 0 : i32
    return %arg0, %c0_i32, %c0_i32_0 : i32, i32, i32
  }
  func.func @transform_8(%arg0: i32, %arg1: i32) -> (i32, i32, i32) {
    %c0_i32 = arith.constant 0 : i32
    %c0_i32_0 = arith.constant 0 : i32
    %c0_i32_1 = arith.constant 0 : i32
    return %arg0, %c0_i32, %c0_i32_0 : i32, i32, i32
  }
  func.func @transform_9(%arg0: i32, %arg1: i32) -> (i32, i32, i32) {
    %c0_i32 = arith.constant 0 : i32
    %c0_i32_0 = arith.constant 0 : i32
    %c0_i32_1 = arith.constant 0 : i32
    return %arg0, %c0_i32, %c0_i32_0 : i32, i32, i32
  }
}

module attributes {stable_mosaic.version = 11 : i64} {
  func.func @_agg_kernel(%arg0: i32, %arg1: i32, %arg2: memref<16x16xbf16, #tpu.memory_space<vmem>>, %arg3: memref<1x8x8xbf16, #tpu.memory_space<vmem>>, %arg4: memref<1x8x2xi32, #tpu.memory_space<vmem>>, %arg5: memref<1x16x64xbf16, #tpu.memory_space<vmem>>, %arg6: memref<1x1x64xf32, #tpu.memory_space<vmem>>, %arg7: memref<1x8x32xbf16, #tpu.memory_space<vmem>>, %arg8: memref<1x1x32xf32, #tpu.memory_space<vmem>>, %arg9: memref<1x1x32xf32, #tpu.memory_space<vmem>>, %arg10: memref<1x1x1xf32, #tpu.memory_space<vmem>>, %arg11: memref<1x1x1xf32, #tpu.memory_space<vmem>>, %arg12: memref<16x64xbf16, #tpu.memory_space<vmem>>, %arg13: memref<8x32xf32, #tpu.memory_space<vmem>>) attributes {dimension_semantics = [#tpu.dimension_semantics<parallel>, #tpu.dimension_semantics<arbitrary>], iteration_bounds = array<i64: 2, 3>, scalar_prefetch = 0 : i64, scratch_operands = 2 : i64, tpu.core_type = #tpu.core_type<tc>, window_params = [{pipeline_mode = #tpu.pipeline_mode<synchronous>, transform_indices = @transform_0, window_bounds = array<i64: 16, 16>}, {transform_indices = @transform_1, window_bounds = array<i64: 1, 8, 8>}, {transform_indices = @transform_2, window_bounds = array<i64: 1, 8, 2>}, {transform_indices = @transform_3, window_bounds = array<i64: 1, 16, 64>}, {transform_indices = @transform_4, window_bounds = array<i64: 1, 1, 64>}, {transform_indices = @transform_5, window_bounds = array<i64: 1, 8, 32>}, {transform_indices = @transform_6, window_bounds = array<i64: 1, 1, 32>}, {transform_indices = @transform_7, window_bounds = array<i64: 1, 1, 32>}, {transform_indices = @transform_8, window_bounds = array<i64: 1, 1, 1>}, {transform_indices = @transform_9, window_bounds = array<i64: 1, 1, 1>}]} {
    %c0_i32 = arith.constant 0 : i32
    %0 = arith.cmpi eq, %arg1, %c0_i32 : i32
    %1 = arith.extui %0 : i1 to i32
    %c0_i32_0 = arith.constant 0 : i32
    %2 = arith.cmpi ne, %1, %c0_i32_0 : i32
    scf.if %2 {
      %c0_22 = arith.constant 0 : index
      %c0_23 = arith.constant 0 : index
      %42 = vector.load %arg2[%c0_22, %c0_23] : memref<16x16xbf16, #tpu.memory_space<vmem>>, vector<16x16xbf16>
      %c0_24 = arith.constant 0 : index
      %c0_25 = arith.constant 0 : index
      %c0_26 = arith.constant 0 : index
      %43 = vector.load %arg5[%c0_24, %c0_25, %c0_26] : memref<1x16x64xbf16, #tpu.memory_space<vmem>>, vector<1x16x64xbf16>
      %44 = vector.shape_cast %43 : vector<1x16x64xbf16> to vector<16x64xbf16>
      %cst_27 = arith.constant dense<0.000000e+00> : vector<16x64xf32>
      %45 = tpu.matmul %42, %44, %cst_27 {dimension_numbers = #tpu.dot_dimension_numbers<[1], [0], [0], [1], [0, 0, 1, 1], [], []>} : vector<16x16xbf16>, vector<16x64xbf16>, vector<16x64xf32> -> vector<16x64xf32>
      %c0_28 = arith.constant 0 : index
      %c0_29 = arith.constant 0 : index
      %c0_30 = arith.constant 0 : index
      %46 = vector.load %arg6[%c0_28, %c0_29, %c0_30] : memref<1x1x64xf32, #tpu.memory_space<vmem>>, vector<1x1x64xf32>
      %47 = vector.shape_cast %46 : vector<1x1x64xf32> to vector<1x64xf32>
      %48 = vector.broadcast %47 : vector<1x64xf32> to vector<16x64xf32>
      %49 = arith.addf %45, %48 : vector<16x64xf32>
      %50 = arith.truncf %49 : vector<16x64xf32> to vector<16x64xbf16>
      %c0_31 = arith.constant 0 : index
      %c0_32 = arith.constant 0 : index
      %51 = vector.load %arg12[%c0_31, %c0_32] : memref<16x64xbf16, #tpu.memory_space<vmem>>, vector<16x64xbf16>
      tpu.vector_store %arg12[%c0_31, %c0_32], %50 {strides = array<i32>} : memref<16x64xbf16, #tpu.memory_space<vmem>>, vector<16x64xbf16>,
      %cst_33 = arith.constant 0.000000e+00 : f32
      %52 = vector.broadcast %cst_33 : f32 to vector<8x32xf32>
      %c0_34 = arith.constant 0 : index
      %c0_35 = arith.constant 0 : index
      %53 = vector.load %arg13[%c0_34, %c0_35] : memref<8x32xf32, #tpu.memory_space<vmem>>, vector<8x32xf32>
      tpu.vector_store %arg13[%c0_34, %c0_35], %52 {strides = array<i32>} : memref<8x32xf32, #tpu.memory_space<vmem>>, vector<8x32xf32>,
    } else {
    }
    %c0 = arith.constant 0 : index
    %c0_1 = arith.constant 0 : index
    %c0_2 = arith.constant 0 : index
    %3 = vector.load %arg3[%c0, %c0_1, %c0_2] : memref<1x8x8xbf16, #tpu.memory_space<vmem>>, vector<1x8x8xbf16>
    %4 = vector.shape_cast %3 : vector<1x8x8xbf16> to vector<8x8xbf16>
    %c0_3 = arith.constant 0 : index
    %c0_4 = arith.constant 0 : index
    %c0_5 = arith.constant 0 : index
    %5 = vector.load %arg7[%c0_3, %c0_4, %c0_5] : memref<1x8x32xbf16, #tpu.memory_space<vmem>>, vector<1x8x32xbf16>
    %6 = vector.shape_cast %5 : vector<1x8x32xbf16> to vector<8x32xbf16>
    %cst = arith.constant dense<0.000000e+00> : vector<8x32xf32>
    %7 = tpu.matmul %4, %6, %cst {dimension_numbers = #tpu.dot_dimension_numbers<[1], [0], [0], [1], [0, 0, 1, 1], [], []>} : vector<8x8xbf16>, vector<8x32xbf16>, vector<8x32xf32> -> vector<8x32xf32>
    %c0_6 = arith.constant 0 : index
    %c0_7 = arith.constant 0 : index
    %c0_8 = arith.constant 0 : index
    %8 = vector.load %arg8[%c0_6, %c0_7, %c0_8] : memref<1x1x32xf32, #tpu.memory_space<vmem>>, vector<1x1x32xf32>
    %9 = vector.shape_cast %8 : vector<1x1x32xf32> to vector<1x32xf32>
    %10 = vector.broadcast %9 : vector<1x32xf32> to vector<8x32xf32>
    %11 = arith.addf %7, %10 : vector<8x32xf32>
    %c0_9 = arith.constant 0 : index
    %c0_10 = arith.constant 0 : index
    %c0_11 = arith.constant 0 : index
    %12 = vector.load %arg4[%c0_9, %c0_10, %c0_11] : memref<1x8x2xi32, #tpu.memory_space<vmem>>, vector<1x8x2xi32>
    %13 = vector.shape_cast %12 : vector<1x8x2xi32> to vector<8x2xi32>
    %14 = tpu.iota {dimensions = array<i32: 1>} : vector<8x16xi32>
    %15 = vector.extract_strided_slice %13 {offsets = [0, 0], sizes = [8, 1], strides = [1, 1]} : vector<8x2xi32> to vector<8x1xi32>
    %16 = vector.broadcast %15 : vector<8x1xi32> to vector<8x16xi32>
    %17 = arith.cmpi eq, %16, %14 : vector<8x16xi32>
    %18 = arith.extui %17 : vector<8x16xi1> to vector<8x16xi32>
    %19 = arith.sitofp %18 : vector<8x16xi32> to vector<8x16xf32>
    %20 = arith.truncf %19 : vector<8x16xf32> to vector<8x16xbf16>
    %21 = vector.extract_strided_slice %13 {offsets = [0, 1], sizes = [8, 1], strides = [1, 1]} : vector<8x2xi32> to vector<8x1xi32>
    %22 = vector.broadcast %21 : vector<8x1xi32> to vector<8x16xi32>
    %23 = arith.cmpi eq, %22, %14 : vector<8x16xi32>
    %24 = arith.extui %23 : vector<8x16xi1> to vector<8x16xi32>
    %25 = arith.sitofp %24 : vector<8x16xi32> to vector<8x16xf32>
    %26 = arith.truncf %25 : vector<8x16xf32> to vector<8x16xbf16>
    %c0_12 = arith.constant 0 : index
    %c0_13 = arith.constant 0 : index
    %27 = vector.load %arg12[%c0_12, %c0_13] : memref<16x64xbf16, #tpu.memory_space<vmem>>, vector<16x64xbf16>
    %28 = vector.extract_strided_slice %27 {offsets = [0, 0], sizes = [16, 32], strides = [1, 1]} : vector<16x64xbf16> to vector<16x32xbf16>
    %cst_14 = arith.constant dense<0.000000e+00> : vector<8x32xf32>
    %29 = tpu.matmul %20, %28, %cst_14 {dimension_numbers = #tpu.dot_dimension_numbers<[1], [0], [0], [1], [0, 0, 1, 1], [], []>} : vector<8x16xbf16>, vector<16x32xbf16>, vector<8x32xf32> -> vector<8x32xf32>
    %30 = vector.extract_strided_slice %27 {offsets = [0, 32], sizes = [16, 32], strides = [1, 1]} : vector<16x64xbf16> to vector<16x32xbf16>
    %cst_15 = arith.constant dense<0.000000e+00> : vector<8x32xf32>
    %31 = tpu.matmul %26, %30, %cst_15 {dimension_numbers = #tpu.dot_dimension_numbers<[1], [0], [0], [1], [0, 0, 1, 1], [], []>} : vector<8x16xbf16>, vector<16x32xbf16>, vector<8x32xf32> -> vector<8x32xf32>
    %32 = arith.mulf %11, %29 : vector<8x32xf32>
    %33 = arith.mulf %32, %31 : vector<8x32xf32>
    %c0_16 = arith.constant 0 : index
    %c0_17 = arith.constant 0 : index
    %34 = vector.load %arg13[%c0_16, %c0_17] : memref<8x32xf32, #tpu.memory_space<vmem>>, vector<8x32xf32>
    %35 = vector.shape_cast %33 : vector<8x32xf32> to vector<1x8x32xf32>
    %cst_18 = arith.constant dense<0.000000e+00> : vector<8x32xf32>
    %36 = vector.multi_reduction <add>, %35, %cst_18 [0] : vector<1x8x32xf32> to vector<8x32xf32>
    %37 = arith.addf %34, %36 : vector<8x32xf32>
    %c0_19 = arith.constant 0 : index
    %c0_20 = arith.constant 0 : index
    %38 = vector.load %arg13[%c0_19, %c0_20] : memref<8x32xf32, #tpu.memory_space<vmem>>, vector<8x32xf32>
    tpu.vector_store %arg13[%c0_19, %c0_20], %37 {strides = array<i32>} : memref<8x32xf32, #tpu.memory_space<vmem>>, vector<8x32xf32>,
    %c2_i32 = arith.constant 2 : i32
    %39 = arith.cmpi eq, %arg1, %c2_i32 : i32
    %40 = arith.extui %39 : i1 to i32
    %c0_i32_21 = arith.constant 0 : i32
    %41 = arith.cmpi ne, %40, %c0_i32_21 : i32
    scf.if %41 {
      %c0_22 = arith.constant 0 : index
      %c0_23 = arith.constant 0 : index
      %42 = vector.load %arg13[%c0_22, %c0_23] : memref<8x32xf32, #tpu.memory_space<vmem>>, vector<8x32xf32>
      %cst_24 = arith.constant dense<0.000000e+00> : vector<32xf32>
      %43 = vector.multi_reduction <add>, %42, %cst_24 [0] : vector<8x32xf32> to vector<32xf32>
      %44 = vector.shape_cast %43 : vector<32xf32> to vector<1x32xf32>
      %c0_25 = arith.constant 0 : index
      %c0_26 = arith.constant 0 : index
      %c0_27 = arith.constant 0 : index
      %45 = vector.load %arg9[%c0_25, %c0_26, %c0_27] : memref<1x1x32xf32, #tpu.memory_space<vmem>>, vector<1x1x32xf32>
      %46 = vector.shape_cast %45 : vector<1x1x32xf32> to vector<1x32xf32>
      %47 = arith.mulf %44, %46 : vector<1x32xf32>
      %cst_28 = arith.constant dense<0.000000e+00> : vector<1xf32>
      %48 = vector.multi_reduction <add>, %47, %cst_28 [1] : vector<1x32xf32> to vector<1xf32>
      %49 = vector.shape_cast %48 : vector<1xf32> to vector<1x1xf32>
      %c0_29 = arith.constant 0 : index
      %c0_30 = arith.constant 0 : index
      %c0_31 = arith.constant 0 : index
      %50 = vector.load %arg10[%c0_29, %c0_30, %c0_31] : memref<1x1x1xf32, #tpu.memory_space<vmem>>, vector<1x1x1xf32>
      %51 = vector.shape_cast %50 : vector<1x1x1xf32> to vector<1x1xf32>
      %52 = arith.addf %49, %51 : vector<1x1xf32>
      %53 = vector.shape_cast %52 : vector<1x1xf32> to vector<1x1x1xf32>
      %c0_32 = arith.constant 0 : index
      %c0_33 = arith.constant 0 : index
      %c0_34 = arith.constant 0 : index
      %54 = vector.load %arg11[%c0_32, %c0_33, %c0_34] : memref<1x1x1xf32, #tpu.memory_space<vmem>>, vector<1x1x1xf32>
      tpu.vector_store %arg11[%c0_32, %c0_33, %c0_34], %53 {strides = array<i32>} : memref<1x1x1xf32, #tpu.memory_space<vmem>>, vector<1x1x1xf32>,
    } else {
    }
    return
  }
  func.func @transform_0(%arg0: i32, %arg1: i32) -> (i32, i32) {
    %c0_i32 = arith.constant 0 : i32
    %c0_i32_0 = arith.constant 0 : i32
    %c0_i32_1 = arith.constant 0 : i32
    return %c0_i32, %c0_i32_0 : i32, i32
  }
  func.func @transform_1(%arg0: i32, %arg1: i32) -> (i32, i32, i32) {
    %c0_i32 = arith.constant 0 : i32
    %c0_i32_0 = arith.constant 0 : i32
    return %arg0, %arg1, %c0_i32 : i32, i32, i32
  }
  func.func @transform_2(%arg0: i32, %arg1: i32) -> (i32, i32, i32) {
    %c0_i32 = arith.constant 0 : i32
    %c0_i32_0 = arith.constant 0 : i32
    return %arg0, %arg1, %c0_i32 : i32, i32, i32
  }
  func.func @transform_3(%arg0: i32, %arg1: i32) -> (i32, i32, i32) {
    %c0_i32 = arith.constant 0 : i32
    %c0_i32_0 = arith.constant 0 : i32
    %c0_i32_1 = arith.constant 0 : i32
    return %arg0, %c0_i32, %c0_i32_0 : i32, i32, i32
  }
  func.func @transform_4(%arg0: i32, %arg1: i32) -> (i32, i32, i32) {
    %c0_i32 = arith.constant 0 : i32
    %c0_i32_0 = arith.constant 0 : i32
    %c0_i32_1 = arith.constant 0 : i32
    return %arg0, %c0_i32, %c0_i32_0 : i32, i32, i32
  }
  func.func @transform_5(%arg0: i32, %arg1: i32) -> (i32, i32, i32) {
    %c0_i32 = arith.constant 0 : i32
    %c0_i32_0 = arith.constant 0 : i32
    %c0_i32_1 = arith.constant 0 : i32
    return %arg0, %c0_i32, %c0_i32_0 : i32, i32, i32
  }
  func.func @transform_6(%arg0: i32, %arg1: i32) -> (i32, i32, i32) {
    %c0_i32 = arith.constant 0 : i32
    %c0_i32_0 = arith.constant 0 : i32
    %c0_i32_1 = arith.constant 0 : i32
    return %arg0, %c0_i32, %c0_i32_0 : i32, i32, i32
  }
  func.func @transform_7(%arg0: i32, %arg1: i32) -> (i32, i32, i32) {
    %c0_i32 = arith.constant 0 : i32
    %c0_i32_0 = arith.constant 0 : i32
    %c0_i32_1 = arith.constant 0 : i32
    return %arg0, %c0_i32, %c0_i32_0 : i32, i32, i32
  }
  func.func @transform_8(%arg0: i32, %arg1: i32) -> (i32, i32, i32) {
    %c0_i32 = arith.constant 0 : i32
    %c0_i32_0 = arith.constant 0 : i32
    %c0_i32_1 = arith.constant 0 : i32
    return %arg0, %c0_i32, %c0_i32_0 : i32, i32, i32
  }
  func.func @transform_9(%arg0: i32, %arg1: i32) -> (i32, i32, i32) {
    %c0_i32 = arith.constant 0 : i32
    %c0_i32_0 = arith.constant 0 : i32
    %c0_i32_1 = arith.constant 0 : i32
    return %arg0, %c0_i32, %c0_i32_0 : i32, i32, i32
  }
}

</mosaic_0001>

<llo_original>
// kernel: tpu_custom_call.1
$region0: #{tpu_custom_call.1}
  #allocation0 [shape = 'u32[]', space=smem, size = 0x4, offset = 0x4, fixed_abs, tag = 'smem constant byte address 0x4 - core index']
  #allocation1 [shape = 'u32[144,128]{1,0:T(1,128)}', space=vmem, size = 0x12000, scoped, tag = 'internal scratch']
  #allocation2 [shape = 'bf16[16,64]{1,0:T(8,128)(2,1)}', space=vmem, size = 0x1000, scoped, tag = 'scratch operand']
  #allocation3 [shape = 'f32[8,32]{1,0:T(8,128)}', space=vmem, size = 0x1000, scoped, tag = 'scratch operand']
  %s0 = inlined_call_operand.vmem [shape: bf16[16,16], index: 0, kind: input, shape index: {}]
  %s1 = inlined_call_operand.vmem [shape: bf16[2,24,8], index: 1, kind: input, shape index: {}]
  %s2 = inlined_call_operand.vmem [shape: s32[2,24,2], index: 2, kind: input, shape index: {}]
  %s3 = inlined_call_operand.vmem [shape: bf16[2,16,64], index: 3, kind: input, shape index: {}]
  %s4 = inlined_call_operand.vmem [shape: f32[2,1,64], index: 4, kind: input, shape index: {}]
  %s5 = inlined_call_operand.vmem [shape: bf16[2,8,32], index: 5, kind: input, shape index: {}]
  %s6 = inlined_call_operand.vmem [shape: f32[2,1,32], index: 6, kind: input, shape index: {}]
  %s7 = inlined_call_operand.vmem [shape: f32[2,1,32], index: 7, kind: input, shape index: {}]
  %s8 = inlined_call_operand.vmem [shape: f32[2,1,1], index: 8, kind: input, shape index: {}]
  %s9 = inlined_call_operand.vmem [shape: f32[2,1,1], index: 9, kind: output, shape index: {}]
  %s10 = sld [smem:[#allocation0]]
  $region77: #{tpu_custom_call.1} parent=0
    _
  %s12 = ssub.s32 1, %s10
  %s13 = scalar_select 0, %s12, %s10
  loop: start=0, step=1, limit=8
  $region2: #{tpu_custom_call.1} parent=0 // loop_pre_header
    _
  $region3: #{tpu_custom_call.1} parent=0 // loop_header
    %s15 = sphi 0, %s19
    %p16 = scmp.ge.s32.totalorder %s15, 8
    %s22 = sphi 0, %s34
    %s23 = sphi 0, %s30
    %s24 = sphi 0, %s22
    %s25 = sphi 0, %s23
    %s26 = sphi 0, %s24
    %s27 = sphi 0, %s25
    %s35 = sphi 0, %s35
    %s37 = sphi 0, %s35
    %s38 = sphi 0, %s37
    %s52 = sphi 0, %s38
    %s60 = sphi 0, %s62
    %s63 = sphi 0, %s60
    %s64 = sphi 0, %s63
    %s80 = sphi 0, %s64
    %s88 = sphi 0, %s90
    %s91 = sphi 0, %s88
    %s92 = sphi 0, %s91
    %s108 = sphi 0, %s92
    %s114 = sphi 0, %s116
    %s117 = sphi 0, %s114
    %s118 = sphi 0, %s117
    %s134 = sphi 0, %s118
    %s140 = sphi 0, %s142
    %s143 = sphi 0, %s140
    %s144 = sphi 0, %s143
    %s160 = sphi 0, %s144
    %s166 = sphi 0, %s168
    %s169 = sphi 0, %s166
    %s170 = sphi 0, %s169
    %s186 = sphi 0, %s170
    %s192 = sphi 0, %s194
    %s195 = sphi 0, %s192
    %s196 = sphi 0, %s195
    %s212 = sphi 0, %s196
    %s218 = sphi 0, %s220
    %s221 = sphi 0, %s218
    %s222 = sphi 0, %s221
    %s238 = sphi 0, %s222
    %s244 = sphi 0, %s246
    %s247 = sphi 0, %s244
    %s248 = sphi 0, %s247
    %s264 = sphi 0, %s248
    %s270 = sphi 0, %s272
    %s273 = sphi 0, %s270
    %s274 = sphi 0, %s273
    %s290 = sphi 0, %s274
  $region4: #{tpu_custom_call.1} parent=0 // loop_header_branch
    %18 = sbr.rel (%p16) target = $region8
  $region5: #{tpu_custom_call.1} parent=0 // loop_body
    %s20 = ssub.s32 %s15, 1
    %s21 = ssub.s32 %s15, 2
    %s28 = sadd.s32 1, %s23
    %p29 = scmp.ge.s32.totalorder %s28, 3
    %s30 = scalar_select %p29, 0, %s28
    %s31 = sadd.s32 1, %s22
    %s32 = scalar_select %p29, %s31, %s22
    %p33 = scmp.ge.s32.totalorder %s32, 2
    %s34 = scalar_select %p33, 0, %s32
    %s36 = sadd.s32 %s35, 1
    %p39 = scmp.eq.s32.totalorder %s15, 5
    %p40 = scmp.ne.s32.totalorder %s35, %s37
    %p41 = scmp.eq.s32.totalorder %s15, 0
    %p42 = por %p40, %p41
    %p43 = scmp.ne.s32.totalorder %s35, %s37
    %p44 = scmp.eq.s32.totalorder %s20, 5
    %p45 = por %p43, %p44
    %p46 = scmp.ne.s32.totalorder %s37, %s38
    %p47 = scmp.eq.s32.totalorder %s20, 0
    %p48 = por %p46, %p47
    %p49 = scmp.ne.s32.totalorder %s37, %s38
    %p50 = scmp.eq.s32.totalorder %s21, 5
    %p51 = por %p49, %p50
    %p53 = scmp.ne.s32.totalorder %s38, %s52
    %p54 = scmp.eq.s32.totalorder %s21, 0
    %p55 = por %p53, %p54
    %s56 = ssub.s32 %s22, %s34
    %s57 = ssub.s32 %s23, %s30
    %s58 = sor.u32 %s56, %s57
    %p59 = scmp.eq.s32.totalorder %s58, 0
    %s61 = sadd.s32 %s60, 1
    %s62 = scalar_select %p59, %s60, %s61
    %p65 = pneg %p59
    %p66 = scmp.eq.s32.totalorder %s15, 5
    %p67 = por %p65, %p66
    %p68 = scmp.ne.s32.totalorder %s60, %s63
    %p69 = scmp.eq.s32.totalorder %s15, 0
    %p70 = por %p68, %p69
    %p71 = scmp.ne.s32.totalorder %s60, %s63
    %p72 = scmp.eq.s32.totalorder %s20, 5
    %p73 = por %p71, %p72
    %p74 = scmp.ne.s32.totalorder %s63, %s64
    %p75 = scmp.eq.s32.totalorder %s20, 0
    %p76 = por %p74, %p75
    %p77 = scmp.ne.s32.totalorder %s63, %s64
    %p78 = scmp.eq.s32.totalorder %s21, 5
    %p79 = por %p77, %p78
    %p81 = scmp.ne.s32.totalorder %s64, %s80
    %p82 = scmp.eq.s32.totalorder %s21, 0
    %p83 = por %p81, %p82
    %s84 = ssub.s32 %s22, %s34
    %s85 = ssub.s32 %s23, %s30
    %s86 = sor.u32 %s84, %s85
    %p87 = scmp.eq.s32.totalorder %s86, 0
    %s89 = sadd.s32 %s88, 1
    %s90 = scalar_select %p87, %s88, %s89
    %p93 = pneg %p87
    %p94 = scmp.eq.s32.totalorder %s15, 5
    %p95 = por %p93, %p94
    %p96 = scmp.ne.s32.totalorder %s88, %s91
    %p97 = scmp.eq.s32.totalorder %s15, 0
    %p98 = por %p96, %p97
    %p99 = scmp.ne.s32.totalorder %s88, %s91
    %p100 = scmp.eq.s32.totalorder %s20, 5
    %p101 = por %p99, %p100
    %p102 = scmp.ne.s32.totalorder %s91, %s92
    %p103 = scmp.eq.s32.totalorder %s20, 0
    %p104 = por %p102, %p103
    %p105 = scmp.ne.s32.totalorder %s91, %s92
    %p106 = scmp.eq.s32.totalorder %s21, 5
    %p107 = por %p105, %p106
    %p109 = scmp.ne.s32.totalorder %s92, %s108
    %p110 = scmp.eq.s32.totalorder %s21, 0
    %p111 = por %p109, %p110
    %s112 = ssub.s32 %s22, %s34
    %p113 = scmp.eq.s32.totalorder %s112, 0
    %s115 = sadd.s32 %s114, 1
    %s116 = scalar_select %p113, %s114, %s115
    %p119 = pneg %p113
    %p120 = scmp.eq.s32.totalorder %s15, 5
    %p121 = por %p119, %p120
    %p122 = scmp.ne.s32.totalorder %s114, %s117
    %p123 = scmp.eq.s32.totalorder %s15, 0
    %p124 = por %p122, %p123
    %p125 = scmp.ne.s32.totalorder %s114, %s117
    %p126 = scmp.eq.s32.totalorder %s20, 5
    %p127 = por %p125, %p126
    %p128 = scmp.ne.s32.totalorder %s117, %s118
    %p129 = scmp.eq.s32.totalorder %s20, 0
    %p130 = por %p128, %p129
    %p131 = scmp.ne.s32.totalorder %s117, %s118
    %p132 = scmp.eq.s32.totalorder %s21, 5
    %p133 = por %p131, %p132
    %p135 = scmp.ne.s32.totalorder %s118, %s134
    %p136 = scmp.eq.s32.totalorder %s21, 0
    %p137 = por %p135, %p136
    %s138 = ssub.s32 %s22, %s34
    %p139 = scmp.eq.s32.totalorder %s138, 0
    %s141 = sadd.s32 %s140, 1
    %s142 = scalar_select %p139, %s140, %s141
    %p145 = pneg %p139
    %p146 = scmp.eq.s32.totalorder %s15, 5
    %p147 = por %p145, %p146
    %p148 = scmp.ne.s32.totalorder %s140, %s143
    %p149 = scmp.eq.s32.totalorder %s15, 0
    %p150 = por %p148, %p149
    %p151 = scmp.ne.s32.totalorder %s140, %s143
    %p152 = scmp.eq.s32.totalorder %s20, 5
    %p153 = por %p151, %p152
    %p154 = scmp.ne.s32.totalorder %s143, %s144
    %p155 = scmp.eq.s32.totalorder %s20, 0
    %p156 = por %p154, %p155
    %p157 = scmp.ne.s32.totalorder %s143, %s144
    %p158 = scmp.eq.s32.totalorder %s21, 5
    %p159 = por %p157, %p158
    %p161 = scmp.ne.s32.totalorder %s144, %s160
    %p162 = scmp.eq.s32.totalorder %s21, 0
    %p163 = por %p161, %p162
    %s164 = ssub.s32 %s22, %s34
    %p165 = scmp.eq.s32.totalorder %s164, 0
    %s167 = sadd.s32 %s166, 1
    %s168 = scalar_select %p165, %s166, %s167
    %p171 = pneg %p165
    %p172 = scmp.eq.s32.totalorder %s15, 5
    %p173 = por %p171, %p172
    %p174 = scmp.ne.s32.totalorder %s166, %s169
    %p175 = scmp.eq.s32.totalorder %s15, 0
    %p176 = por %p174, %p175
    %p177 = scmp.ne.s32.totalorder %s166, %s169
    %p178 = scmp.eq.s32.totalorder %s20, 5
    %p179 = por %p177, %p178
    %p180 = scmp.ne.s32.totalorder %s169, %s170
    %p181 = scmp.eq.s32.totalorder %s20, 0
    %p182 = por %p180, %p181
    %p183 = scmp.ne.s32.totalorder %s169, %s170
    %p184 = scmp.eq.s32.totalorder %s21, 5
    %p185 = por %p183, %p184
    %p187 = scmp.ne.s32.totalorder %s170, %s186
    %p188 = scmp.eq.s32.totalorder %s21, 0
    %p189 = por %p187, %p188
    %s190 = ssub.s32 %s22, %s34
    %p191 = scmp.eq.s32.totalorder %s190, 0
    %s193 = sadd.s32 %s192, 1
    %s194 = scalar_select %p191, %s192, %s193
    %p197 = pneg %p191
    %p198 = scmp.eq.s32.totalorder %s15, 5
    %p199 = por %p197, %p198
    %p200 = scmp.ne.s32.totalorder %s192, %s195
    %p201 = scmp.eq.s32.totalorder %s15, 0
    %p202 = por %p200, %p201
    %p203 = scmp.ne.s32.totalorder %s192, %s195
    %p204 = scmp.eq.s32.totalorder %s20, 5
    %p205 = por %p203, %p204
    %p206 = scmp.ne.s32.totalorder %s195, %s196
    %p207 = scmp.eq.s32.totalorder %s20, 0
    %p208 = por %p206, %p207
    %p209 = scmp.ne.s32.totalorder %s195, %s196
    %p210 = scmp.eq.s32.totalorder %s21, 5
    %p211 = por %p209, %p210
    %p213 = scmp.ne.s32.totalorder %s196, %s212
    %p214 = scmp.eq.s32.totalorder %s21, 0
    %p215 = por %p213, %p214
    %s216 = ssub.s32 %s22, %s34
    %p217 = scmp.eq.s32.totalorder %s216, 0
    %s219 = sadd.s32 %s218, 1
    %s220 = scalar_select %p217, %s218, %s219
    %p223 = pneg %p217
    %p224 = scmp.eq.s32.totalorder %s15, 5
    %p225 = por %p223, %p224
    %p226 = scmp.ne.s32.totalorder %s218, %s221
    %p227 = scmp.eq.s32.totalorder %s15, 0
    %p228 = por %p226, %p227
    %p229 = scmp.ne.s32.totalorder %s218, %s221
    %p230 = scmp.eq.s32.totalorder %s20, 5
    %p231 = por %p229, %p230
    %p232 = scmp.ne.s32.totalorder %s221, %s222
    %p233 = scmp.eq.s32.totalorder %s20, 0
    %p234 = por %p232, %p233
    %p235 = scmp.ne.s32.totalorder %s221, %s222
    %p236 = scmp.eq.s32.totalorder %s21, 5
    %p237 = por %p235, %p236
    %p239 = scmp.ne.s32.totalorder %s222, %s238
    %p240 = scmp.eq.s32.totalorder %s21, 0
    %p241 = por %p239, %p240
    %s242 = ssub.s32 %s22, %s34
    %p243 = scmp.eq.s32.totalorder %s242, 0
    %s245 = sadd.s32 %s244, 1
    %s246 = scalar_select %p243, %s244, %s245
    %p249 = pneg %p243
    %p250 = scmp.eq.s32.totalorder %s15, 5
    %p251 = por %p249, %p250
    %p252 = scmp.ne.s32.totalorder %s244, %s247
    %p253 = scmp.eq.s32.totalorder %s15, 0
    %p254 = por %p252, %p253
    %p255 = scmp.ne.s32.totalorder %s244, %s247
    %p256 = scmp.eq.s32.totalorder %s20, 5
    %p257 = por %p255, %p256
    %p258 = scmp.ne.s32.totalorder %s247, %s248
    %p259 = scmp.eq.s32.totalorder %s20, 0
    %p260 = por %p258, %p259
    %p261 = scmp.ne.s32.totalorder %s247, %s248
    %p262 = scmp.eq.s32.totalorder %s21, 5
    %p263 = por %p261, %p262
    %p265 = scmp.ne.s32.totalorder %s248, %s264
    %p266 = scmp.eq.s32.totalorder %s21, 0
    %p267 = por %p265, %p266
    %s268 = ssub.s32 %s22, %s34
    %p269 = scmp.eq.s32.totalorder %s268, 0
    %s271 = sadd.s32 %s270, 1
    %s272 = scalar_select %p269, %s270, %s271
    %p275 = pneg %p269
    %p276 = scmp.eq.s32.totalorder %s15, 5
    %p277 = por %p275, %p276
    %p278 = scmp.ne.s32.totalorder %s270, %s273
    %p279 = scmp.eq.s32.totalorder %s15, 0
    %p280 = por %p278, %p279
    %p281 = scmp.ne.s32.totalorder %s270, %s273
    %p282 = scmp.eq.s32.totalorder %s20, 5
    %p283 = por %p281, %p282
    %p284 = scmp.ne.s32.totalorder %s273, %s274
    %p285 = scmp.eq.s32.totalorder %s20, 0
    %p286 = por %p284, %p285
    %p287 = scmp.ne.s32.totalorder %s273, %s274
    %p288 = scmp.eq.s32.totalorder %s21, 5
    %p289 = por %p287, %p288
    %p291 = scmp.ne.s32.totalorder %s274, %s290
    %p292 = scmp.eq.s32.totalorder %s21, 0
    %p293 = por %p291, %p292
    %p294 = scmp.le.s32.totalorder 1, %s15
    %p295 = scmp.lt.s32.totalorder %s15, 7
    %p296 = pnand %p294, %p295
    %p297 = pneg %p296
    // Predicated region
    $region9: #{tpu_custom_call.1} parent=5 // pred_check
      _
    $region10: #{tpu_custom_call.1} parent=5 // pred_check_branch
      %299 = sbr.rel (%p296) target = $region12
    $region11: #{tpu_custom_call.1} parent=5 // pred_region
      %s300 = ssub.s32 %s15, 1
      // Predicated region
      $region13: #{tpu_custom_call.1} parent=11 // pred_check
        %p301 = pneg %p48
      $region14: #{tpu_custom_call.1} parent=11 // pred_check_branch
        %303 = sbr.rel (%p301) target = $region16
      $region15: #{tpu_custom_call.1} parent=11 // pred_region
        _
      $region16: #{tpu_custom_call.1} parent=11 // pred_fallthru
        _
      // Predicated region
      $region17: #{tpu_custom_call.1} parent=11 // pred_check
        %p304 = pneg %p130
      $region18: #{tpu_custom_call.1} parent=11 // pred_check_branch
        %306 = sbr.rel (%p304) target = $region20
      $region19: #{tpu_custom_call.1} parent=11 // pred_region
        %p307 = scmp.lt.s32.totalorder %s24, 1
        %s308 = scalar_select %p307, %s24, 1
        %s309 = smul.addr %s308, 2
        %s310 = smul.addr %s309, 4
        %s311 = scalar_lea.vmem %s3, %s310
      $region20: #{tpu_custom_call.1} parent=11 // pred_fallthru
        _
      // Predicated region
      $region21: #{tpu_custom_call.1} parent=11 // pred_check
        %p312 = pneg %p156
      $region22: #{tpu_custom_call.1} parent=11 // pred_check_branch
        %314 = sbr.rel (%p312) target = $region24
      $region23: #{tpu_custom_call.1} parent=11 // pred_region
        %p315 = scmp.lt.s32.totalorder %s24, 1
        %s316 = scalar_select %p315, %s24, 1
        %s317 = scalar_lea.vmem %s4, %s316
      $region24: #{tpu_custom_call.1} parent=11 // pred_fallthru
        _
      // Predicated region
      $region25: #{tpu_custom_call.1} parent=11 // pred_check
        %p318 = pneg %p182
      $region26: #{tpu_custom_call.1} parent=11 // pred_check_branch
        %320 = sbr.rel (%p318) target = $region28
      $region27: #{tpu_custom_call.1} parent=11 // pred_region
        %p321 = scmp.lt.s32.totalorder %s24, 1
        %s322 = scalar_select %p321, %s24, 1
        %s323 = smul.addr %s322, 4
        %s324 = scalar_lea.vmem %s5, %s323
      $region28: #{tpu_custom_call.1} parent=11 // pred_fallthru
        _
      // Predicated region
      $region29: #{tpu_custom_call.1} parent=11 // pred_check
        %p325 = pneg %p208
      $region30: #{tpu_custom_call.1} parent=11 // pred_check_branch
        %327 = sbr.rel (%p325) target = $region32
      $region31: #{tpu_custom_call.1} parent=11 // pred_region
        %p328 = scmp.lt.s32.totalorder %s24, 1
        %s329 = scalar_select %p328, %s24, 1
        %s330 = scalar_lea.vmem %s6, %s329
      $region32: #{tpu_custom_call.1} parent=11 // pred_fallthru
        _
      // Predicated region
      $region33: #{tpu_custom_call.1} parent=11 // pred_check
        %p331 = pneg %p234
      $region34: #{tpu_custom_call.1} parent=11 // pred_check_branch
        %333 = sbr.rel (%p331) target = $region36
      $region35: #{tpu_custom_call.1} parent=11 // pred_region
        %p334 = scmp.lt.s32.totalorder %s24, 1
        %s335 = scalar_select %p334, %s24, 1
        %s336 = scalar_lea.vmem %s7, %s335
      $region36: #{tpu_custom_call.1} parent=11 // pred_fallthru
        _
      // Predicated region
      $region37: #{tpu_custom_call.1} parent=11 // pred_check
        %p337 = pneg %p260
      $region38: #{tpu_custom_call.1} parent=11 // pred_check_branch
        %339 = sbr.rel (%p337) target = $region40
      $region39: #{tpu_custom_call.1} parent=11 // pred_region
        %p340 = scmp.lt.s32.totalorder %s24, 1
        %s341 = scalar_select %p340, %s24, 1
        %s342 = scalar_lea.vmem %s8, %s341
      $region40: #{tpu_custom_call.1} parent=11 // pred_fallthru
        _
    $region12: #{tpu_custom_call.1} parent=5 // pred_fallthru
      _
    %p343 = scmp.lt.s32.totalorder %s15, 6
    // Predicated region
    $region41: #{tpu_custom_call.1} parent=5 // pred_check
      %p344 = pneg %p343
    $region42: #{tpu_custom_call.1} parent=5 // pred_check_branch
      %346 = sbr.rel (%p344) target = $region44
    $region43: #{tpu_custom_call.1} parent=5 // pred_region
      // Predicated region
      $region45: #{tpu_custom_call.1} parent=43 // pred_check
        %p347 = pneg %p70
      $region46: #{tpu_custom_call.1} parent=43 // pred_check_branch
        %349 = sbr.rel (%p347) target = $region48
      $region47: #{tpu_custom_call.1} parent=43 // pred_region
        %p350 = scmp.lt.s32.totalorder %s22, 1
        %s351 = scalar_select %p350, %s22, 1
        %p352 = scmp.lt.s32.totalorder %s23, 2
        %s353 = scalar_select %p352, %s23, 2
        %s354 = smul.addr %s351, 3
        %s355 = sadd.s32 %s353, %s354
        %s356 = smul.addr %s355, 4
        %s357 = scalar_lea.vmem %s1, %s356
      $region48: #{tpu_custom_call.1} parent=43 // pred_fallthru
        _
      // Predicated region
      $region49: #{tpu_custom_call.1} parent=43 // pred_check
        %p358 = pneg %p98
      $region50: #{tpu_custom_call.1} parent=43 // pred_check_branch
        %360 = sbr.rel (%p358) target = $region52
      $region51: #{tpu_custom_call.1} parent=43 // pred_region
        %p361 = scmp.lt.s32.totalorder %s22, 1
        %s362 = scalar_select %p361, %s22, 1
        %p363 = scmp.lt.s32.totalorder %s23, 2
        %s364 = scalar_select %p363, %s23, 2
        %s365 = smul.addr %s362, 3
        %s366 = sadd.s32 %s364, %s365
        %s367 = smul.addr %s366, 8
        %s368 = scalar_lea.vmem %s2, %s367
      $region52: #{tpu_custom_call.1} parent=43 // pred_fallthru
        _
    $region44: #{tpu_custom_call.1} parent=5 // pred_fallthru
      _
    %p369 = scmp.le.s32.totalorder 1, %s15
    %p370 = scmp.lt.s32.totalorder %s15, 7
    %p371 = pnand %p369, %p370
    %p372 = pneg %p371
    // Predicated region
    $region53: #{tpu_custom_call.1} parent=5 // pred_check
      _
    $region54: #{tpu_custom_call.1} parent=5 // pred_check_branch
      %374 = sbr.rel (%p371) target = $region56
    $region55: #{tpu_custom_call.1} parent=5 // pred_region
      %s375 = ssub.s32 %s15, 1
      %p376 = pneg %p48
      %p377 = pneg %p45
      %p378 = scmp.lt.s32.totalorder %s24, 1
      %s379 = scalar_select %p378, %s24, 1
      %p380 = scmp.lt.s32.totalorder %s25, 2
      %s381 = scalar_select %p380, %s25, 2
      %s382 = smul.addr %s379, 3
      %s383 = sadd.s32 %s381, %s382
      %s384 = smul.addr %s383, 4
      %s385 = scalar_lea.vmem %s1, %s384
      %p386 = pneg %p76
      %p387 = pneg %p73
      %p388 = scmp.lt.s32.totalorder %s24, 1
      %s389 = scalar_select %p388, %s24, 1
      %p390 = scmp.lt.s32.totalorder %s25, 2
      %s391 = scalar_select %p390, %s25, 2
      %s392 = smul.addr %s389, 3
      %s393 = sadd.s32 %s391, %s392
      %s394 = smul.addr %s393, 8
      %s395 = scalar_lea.vmem %s2, %s394
      %p396 = pneg %p104
      %p397 = pneg %p101
      %p398 = scmp.lt.s32.totalorder %s24, 1
      %s399 = scalar_select %p398, %s24, 1
      %s400 = smul.addr %s399, 2
      %s401 = smul.addr %s400, 4
      %s402 = scalar_lea.vmem %s3, %s401
      %p403 = pneg %p130
      %p404 = pneg %p127
      %p405 = scmp.lt.s32.totalorder %s24, 1
      %s406 = scalar_select %p405, %s24, 1
      %s407 = scalar_lea.vmem %s4, %s406
      %p408 = pneg %p156
      %p409 = pneg %p153
      %p410 = scmp.lt.s32.totalorder %s24, 1
      %s411 = scalar_select %p410, %s24, 1
      %s412 = smul.addr %s411, 4
      %s413 = scalar_lea.vmem %s5, %s412
      %p414 = pneg %p182
      %p415 = pneg %p179
      %p416 = scmp.lt.s32.totalorder %s24, 1
      %s417 = scalar_select %p416, %s24, 1
      %s418 = scalar_lea.vmem %s6, %s417
      %p419 = pneg %p208
      %p420 = pneg %p205
      %p421 = scmp.lt.s32.totalorder %s24, 1
      %s422 = scalar_select %p421, %s24, 1
      %s423 = scalar_lea.vmem %s7, %s422
      %p424 = pneg %p234
      %p425 = pneg %p231
      %p426 = scmp.lt.s32.totalorder %s24, 1
      %s427 = scalar_select %p426, %s24, 1
      %s428 = scalar_lea.vmem %s8, %s427
      %p429 = pneg %p260
      %p430 = pneg %p257
      %p431 = pneg %p286
      %p432 = pneg %p283
      %p433 = scmp.lt.s32.totalorder %s24, 1
      %s434 = scalar_select %p433, %s24, 1
      %s435 = scalar_lea.vmem %s9, %s434
      %p436 = scmp.lt.s32.totalorder %s24, 1
      %s437 = scalar_select %p436, %s24, 1
      %p438 = scmp.lt.s32.totalorder %s25, 2
      %s439 = scalar_select %p438, %s25, 2
      %s440 = smul.addr %s437, 3
      %s441 = sadd.s32 %s439, %s440
      %s442 = smul.addr %s441, 4
      %s443 = scalar_lea.vmem %s1, %s442
      %p444 = scmp.lt.s32.totalorder %s24, 1
      %s445 = scalar_select %p444, %s24, 1
      %p446 = scmp.lt.s32.totalorder %s25, 2
      %s447 = scalar_select %p446, %s25, 2
      %s448 = smul.addr %s445, 3
      %s449 = sadd.s32 %s447, %s448
      %s450 = smul.addr %s449, 8
      %s451 = scalar_lea.vmem %s2, %s450
      %p452 = scmp.lt.s32.totalorder %s24, 1
      %s453 = scalar_select %p452, %s24, 1
      %s454 = smul.addr %s453, 2
      %s455 = smul.addr %s454, 4
      %s456 = scalar_lea.vmem %s3, %s455
      %p457 = scmp.lt.s32.totalorder %s24, 1
      %s458 = scalar_select %p457, %s24, 1
      %s459 = scalar_lea.vmem %s4, %s458
      %p460 = scmp.lt.s32.totalorder %s24, 1
      %s461 = scalar_select %p460, %s24, 1
      %s462 = smul.addr %s461, 4
      %s463 = scalar_lea.vmem %s5, %s462
      %p464 = scmp.lt.s32.totalorder %s24, 1
      %s465 = scalar_select %p464, %s24, 1
      %s466 = scalar_lea.vmem %s6, %s465
      %p467 = scmp.lt.s32.totalorder %s24, 1
      %s468 = scalar_select %p467, %s24, 1
      %s469 = scalar_lea.vmem %s7, %s468
      %p470 = scmp.lt.s32.totalorder %s24, 1
      %s471 = scalar_select %p470, %s24, 1
      %s472 = scalar_lea.vmem %s8, %s471
      %p473 = scmp.lt.s32.totalorder %s24, 1
      %s474 = scalar_select %p473, %s24, 1
      %s475 = scalar_lea.vmem %s9, %s474
      %p477 = scmp.eq.s32.totalorder %s25, 0
      // Predicated region
      $region57: #{tpu_custom_call.1} parent=55 // pred_check
        %p478 = pneg %p477
      $region58: #{tpu_custom_call.1} parent=55 // pred_check_branch
        %480 = sbr.rel (%p478) target = $region60
      $region59: #{tpu_custom_call.1} parent=55 // pred_region
        %v481 = vld [vmem:[%s0] sm:$0xf]
        %v482 = vld [vmem:[%s0 + $0x4] sm:$0xf]
        %v483 = vld [vmem:[%s456] sm:$0xf]
        %v484 = vld [vmem:[%s456 + $0x4] sm:$0xf]
        %v485 = vld [vmem:[%s459] sm:$0x1]
        %v487 = vlaneseq
        %v488 = vshrl.u32 %v487, 7
        %v489 = vsub.s32 0, %v488
        %v490 = vrot.slane %v485, %v489
        %v494 = vunpack.c.l.b16 %v481
        %v495 = vunpack.c.l.b16 %v482
        %v496 = vpack.c.b16 %v495, %v494
        %v499 = vunpack.c.l.b16 %v483
        %v500 = vunpack.c.l.b16 %v484
        %v501 = vpack.c.b16 %v500, %v499
        %vm503 = vcmask 130048
        %v505 = vsel %vm503, %v496, 0
        %507 = vmatprep.subr.bf16.mxu0 0
        %508 = vmatpush1.bf16.msra.mxu0 0
        %509 = vmatprep.subr.bf16.mxu0 0
        %510 = vmatpush1.bf16.msra.mxu0 0
        %511 = vmatprep.subr.bf16.mxu0 0
        %512 = vmatpush1.bf16.msra.mxu0 0
        %513 = vmatprep.subr.bf16.mxu0 0
        %514 = vmatpush1.bf16.msra.mxu0 0
        %515 = vmatprep.subr.bf16.mxu0 0
        %516 = vmatpush1.bf16.msra.mxu0 0
        %517 = vmatprep.subr.bf16.mxu0 0
        %518 = vmatpush1.bf16.msra.mxu0 0
        %519 = vmatprep.subr.bf16.mxu0 0
        %520 = vmatpush1.bf16.msra.mxu0 0
        %521 = vmatprep.subr.bf16.mxu0 0
        %522 = vmatpush1.bf16.msra.mxu0 %v501
        %523 = vmatprep.subr.bf16.mxu0 0
        %524 = vmatpush2.bf16.msra.mxu0 0
        %525 = vmatprep.subr.bf16.mxu0 0
        %526 = vmatpush2.bf16.msra.mxu0 0
        %527 = vmatprep.subr.bf16.mxu0 0
        %528 = vmatpush2.bf16.msra.mxu0 0
        %529 = vmatprep.subr.bf16.mxu0 0
        %530 = vmatpush2.bf16.msra.mxu0 0
        %531 = vmatprep.subr.bf16.mxu0 0
        %532 = vmatpush2.bf16.msra.mxu0 0
        %533 = vmatprep.subr.bf16.mxu0 0
        %534 = vmatpush2.bf16.msra.mxu0 0
        %535 = vmatprep.subr.bf16.mxu0 0
        %536 = vmatpush2.bf16.msra.mxu0 0
        %537 = vmatprep.subr.bf16.mxu0 0
        %538 = vmatpush2.bf16.msra.mxu0 0
        %539 = vmatprep.mubr.bf16.mxu0 0
        %540 = vmatmul.mubr.bf16.gmra.mxu0 %v505
        %v541 = vpop.f32.mrf.mxu0
        %v542 = vadd.f32 %v490, %v541
        %v543 = vpop.f32.mrf.mxu0
        %v544 = vpop.f32.mrf.mxu0
        %v545 = vadd.f32 %v490, %v544
        %v546 = vpop.f32.mrf.mxu0
        %547 = vdwg.mxu0
        %v548 = vpack.c.bf16 %v545, %v542
        %v550 = vunpack.c.l.b16 %v548
        %v551 = vunpack.c.h.b16 %v548
        %v552 = vpack.c.b16 %v550, %v550
        %v553 = vpack.c.b16 %v551, %v551
        %vm556 = vcmask 519168
        %557 = vst.msk [vmem:[#allocation2] sm:$0xf] %vm556, %v552
        %558 = vst.msk [vmem:[#allocation2 + $0x4] sm:$0xf] %vm556, %v553
        %vm559 = vcmask 261120
        %560 = vst.msk [vmem:[#allocation3] sm:$0xff] %vm559, 0.0
      $region60: #{tpu_custom_call.1} parent=55 // pred_fallthru
        _
      %v561 = vld [vmem:[%s443] sm:$0xf]
      %v562 = vld [vmem:[%s463] sm:$0xf]
      %v563 = vld [vmem:[%s466] sm:$0x1]
      %v565 = vlaneseq
      %v566 = vshrl.u32 %v565, 7
      %v567 = vsub.s32 0, %v566
      %v568 = vrot.slane %v563, %v567
      %vm570 = vcmask 64512
      %v572 = vsel %vm570, %v561, 0
      %vm574 = vcmask 1043456
      %v576 = vsel %vm574, %v562, 0
      %578 = vmatprep.subr.bf16.mxu0 0
      %579 = vmatpush1.bf16.msra.mxu0 0
      %580 = vmatprep.subr.bf16.mxu0 0
      %581 = vmatpush1.bf16.msra.mxu0 0
      %582 = vmatprep.subr.bf16.mxu0 0
      %583 = vmatpush1.bf16.msra.mxu0 0
      %584 = vmatprep.subr.bf16.mxu0 0
      %585 = vmatpush1.bf16.msra.mxu0 0
      %586 = vmatprep.subr.bf16.mxu0 0
      %587 = vmatpush1.bf16.msra.mxu0 0
      %588 = vmatprep.subr.bf16.mxu0 0
      %589 = vmatpush1.bf16.msra.mxu0 0
      %590 = vmatprep.subr.bf16.mxu0 0
      %591 = vmatpush1.bf16.msra.mxu0 0
      %592 = vmatprep.subr.bf16.mxu0 0
      %593 = vmatpush1.bf16.msra.mxu0 %v576
      %594 = vmatprep.subr.bf16.mxu0 0
      %595 = vmatpush2.bf16.msra.mxu0 0
      %596 = vmatprep.subr.bf16.mxu0 0
      %597 = vmatpush2.bf16.msra.mxu0 0
      %598 = vmatprep.subr.bf16.mxu0 0
      %599 = vmatpush2.bf16.msra.mxu0 0
      %600 = vmatprep.subr.bf16.mxu0 0
      %601 = vmatpush2.bf16.msra.mxu0 0
      %602 = vmatprep.subr.bf16.mxu0 0
      %603 = vmatpush2.bf16.msra.mxu0 0
      %604 = vmatprep.subr.bf16.mxu0 0
      %605 = vmatpush2.bf16.msra.mxu0 0
      %606 = vmatprep.subr.bf16.mxu0 0
      %607 = vmatpush2.bf16.msra.mxu0 0
      %608 = vmatprep.subr.bf16.mxu0 0
      %609 = vmatpush2.bf16.msra.mxu0 0
      %610 = vmatprep.mubr.bf16.mxu0 0
      %611 = vmatmul.mubr.bf16.gmra.mxu0 %v572
      %v612 = vpop.f32.mrf.mxu0
      %v613 = vadd.f32 %v568, %v612
      %v614 = vpop.f32.mrf.mxu0
      %v615 = vpop.f32.mrf.mxu0
      %v616 = vpop.f32.mrf.mxu0
      %617 = vdwg.mxu0
      %v618 = vld [vmem:[%s451] sm:$0xff]
      %v619 = vlaneseq
      %v620 = vand.u32 %v619, 127
      %621 = vset.pattern.permute.xlu0 0
      %622 = vperm.xlu0 %621, %v618
      %v623 = vpop.permute.xlu0 %622
      %vm624 = vcmp.eq.s32.totalorder %v623, %v620
      %v625 = vsel %vm624, 1, 0
      %v626 = vcvt.s32.f32 %v625
      %v627 = vpack.c.bf16 %v626, %v626
      %628 = vset.pattern.permute.xlu0 1
      %629 = vperm.xlu0 %628, %v618
      %v630 = vpop.permute.xlu0 %629
      %vm631 = vcmp.eq.s32.totalorder %v630, %v620
      %v632 = vsel %vm631, 1, 0
      %v633 = vcvt.s32.f32 %v632
      %v634 = vpack.c.bf16 %v633, %v633
      %v635 = vld [vmem:[#allocation2] sm:$0xf]
      %v636 = vld [vmem:[#allocation2 + $0x4] sm:$0xf]
      %v639 = vunpack.c.l.b16 %v635
      %v640 = vunpack.c.l.b16 %v636
      %v641 = vpack.c.b16 %v640, %v639
      %vm643 = vcmask 130048
      %v645 = vsel %vm643, %v627, 0
      %647 = vmatprep.subr.bf16.mxu0 0
      %648 = vmatpush1.bf16.msra.mxu0 0
      %649 = vmatprep.subr.bf16.mxu0 0
      %650 = vmatpush1.bf16.msra.mxu0 0
      %651 = vmatprep.subr.bf16.mxu0 0
      %652 = vmatpush1.bf16.msra.mxu0 0
      %653 = vmatprep.subr.bf16.mxu0 0
      %654 = vmatpush1.bf16.msra.mxu0 0
      %655 = vmatprep.subr.bf16.mxu0 0
      %656 = vmatpush1.bf16.msra.mxu0 0
      %657 = vmatprep.subr.bf16.mxu0 0
      %658 = vmatpush1.bf16.msra.mxu0 0
      %659 = vmatprep.subr.bf16.mxu0 0
      %660 = vmatpush1.bf16.msra.mxu0 0
      %661 = vmatprep.subr.bf16.mxu0 0
      %662 = vmatpush1.bf16.msra.mxu0 %v641
      %663 = vmatprep.subr.bf16.mxu0 0
      %664 = vmatpush2.bf16.msra.mxu0 0
      %665 = vmatprep.subr.bf16.mxu0 0
      %666 = vmatpush2.bf16.msra.mxu0 0
      %667 = vmatprep.subr.bf16.mxu0 0
      %668 = vmatpush2.bf16.msra.mxu0 0
      %669 = vmatprep.subr.bf16.mxu0 0
      %670 = vmatpush2.bf16.msra.mxu0 0
      %671 = vmatprep.subr.bf16.mxu0 0
      %672 = vmatpush2.bf16.msra.mxu0 0
      %673 = vmatprep.subr.bf16.mxu0 0
      %674 = vmatpush2.bf16.msra.mxu0 0
      %675 = vmatprep.subr.bf16.mxu0 0
      %676 = vmatpush2.bf16.msra.mxu0 0
      %677 = vmatprep.subr.bf16.mxu0 0
      %678 = vmatpush2.bf16.msra.mxu0 0
      %679 = vmatprep.mubr.bf16.mxu0 0
      %680 = vmatmul.mubr.bf16.gmra.mxu0 %v645
      %v681 = vpop.f32.mrf.mxu0
      %v682 = vadd.f32 0.0, %v681
      %v683 = vpop.f32.mrf.mxu0
      %v684 = vpop.f32.mrf.mxu0
      %v685 = vpop.f32.mrf.mxu0
      %686 = vdwg.mxu0
      %687 = vrot.lane.b32.xlu0 %v641, 96
      %v688 = vpop.permute.xlu0 %687
      %v691 = vsel %vm643, %v634, 0
      %693 = vmatprep.subr.bf16.mxu0 0
      %694 = vmatpush1.bf16.msra.mxu0 0
      %695 = vmatprep.subr.bf16.mxu0 0
      %696 = vmatpush1.bf16.msra.mxu0 0
      %697 = vmatprep.subr.bf16.mxu0 0
      %698 = vmatpush1.bf16.msra.mxu0 0
      %699 = vmatprep.subr.bf16.mxu0 0
      %700 = vmatpush1.bf16.msra.mxu0 0
      %701 = vmatprep.subr.bf16.mxu0 0
      %702 = vmatpush1.bf16.msra.mxu0 0
      %703 = vmatprep.subr.bf16.mxu0 0
      %704 = vmatpush1.bf16.msra.mxu0 0
      %705 = vmatprep.subr.bf16.mxu0 0
      %706 = vmatpush1.bf16.msra.mxu0 0
      %707 = vmatprep.subr.bf16.mxu0 0
      %708 = vmatpush1.bf16.msra.mxu0 %v688
      %709 = vmatprep.subr.bf16.mxu0 0
      %710 = vmatpush2.bf16.msra.mxu0 0
      %711 = vmatprep.subr.bf16.mxu0 0
      %712 = vmatpush2.bf16.msra.mxu0 0
      %713 = vmatprep.subr.bf16.mxu0 0
      %714 = vmatpush2.bf16.msra.mxu0 0
      %715 = vmatprep.subr.bf16.mxu0 0
      %716 = vmatpush2.bf16.msra.mxu0 0
      %717 = vmatprep.subr.bf16.mxu0 0
      %718 = vmatpush2.bf16.msra.mxu0 0
      %719 = vmatprep.subr.bf16.mxu0 0
      %720 = vmatpush2.bf16.msra.mxu0 0
      %721 = vmatprep.subr.bf16.mxu0 0
      %722 = vmatpush2.bf16.msra.mxu0 0
      %723 = vmatprep.subr.bf16.mxu0 0
      %724 = vmatpush2.bf16.msra.mxu0 0
      %725 = vmatprep.mubr.bf16.mxu0 0
      %726 = vmatmul.mubr.bf16.gmra.mxu0 %v691
      %v727 = vpop.f32.mrf.mxu0
      %v728 = vadd.f32 0.0, %v727
      %v729 = vpop.f32.mrf.mxu0
      %v730 = vpop.f32.mrf.mxu0
      %v731 = vpop.f32.mrf.mxu0
      %732 = vdwg.mxu0
      %v733 = vmul.f32 %v613, %v682
      %v734 = vmul.f32 %v733, %v728
      %v735 = vld [vmem:[#allocation3] sm:$0xff]
      %v736 = vadd.f32 %v734, 0.0
      %v737 = vadd.f32 %v735, %v736
      %vm738 = vcmask 261120
      %739 = vst.msk [vmem:[#allocation3] sm:$0xff] %vm738, %v737
      %p740 = scmp.eq.s32.totalorder %s25, 2
      // Predicated region
      $region61: #{tpu_custom_call.1} parent=55 // pred_check
        %p741 = pneg %p740
      $region62: #{tpu_custom_call.1} parent=55 // pred_check_branch
        %743 = sbr.rel (%p741) target = $region64
      $region63: #{tpu_custom_call.1} parent=55 // pred_region
        %v744 = vld [vmem:[#allocation3] sm:$0xff]
        %v745 = vsel %vm738, %v744, 0.0
        %v746 = vrot.slane %v745, 4
        %v747 = vadd.f32 %v745, %v746
        %v748 = vrot.slane %v747, 2
        %v749 = vadd.f32 %v747, %v748
        %v750 = vrot.slane %v749, 1
        %v751 = vadd.f32 %v749, %v750
        %v752 = vld [vmem:[%s469] sm:$0x1]
        %v753 = vmul.f32 %v751, %v752
        %vm754 = vcmask 253952
        %v755 = vsel %vm754, %v753, 0.0
        %756 = vadd.xlane.f32.xlu0 %v755
        %v757 = vpop.xlane.xlu0 %756
        %v758 = vld [vmem:[%s472] sm:$0x1]
        %v759 = vadd.f32 %v757, %v758
        %vm760 = vcmask 0
        %761 = vst.msk [vmem:[%s475] sm:$0x1] %vm760, %v759
      $region64: #{tpu_custom_call.1} parent=55 // pred_fallthru
        _
      %p762 = scmp.lt.s32.totalorder %s24, 1
      %s763 = scalar_select %p762, %s24, 1
      %s764 = scalar_lea.vmem %s9, %s763
      // Predicated region
      $region65: #{tpu_custom_call.1} parent=55 // pred_check
        %p765 = pneg %p283
      $region66: #{tpu_custom_call.1} parent=55 // pred_check_branch
        %767 = sbr.rel (%p765) target = $region68
      $region67: #{tpu_custom_call.1} parent=55 // pred_region
        _
      $region68: #{tpu_custom_call.1} parent=55 // pred_fallthru
        _
    $region56: #{tpu_custom_call.1} parent=5 // pred_fallthru
      _
    %p768 = scmp.le.s32.totalorder 2, %s15
    // Predicated region
    $region69: #{tpu_custom_call.1} parent=5 // pred_check
      %p769 = pneg %p768
    $region70: #{tpu_custom_call.1} parent=5 // pred_check_branch
      %771 = sbr.rel (%p769) target = $region72
    $region71: #{tpu_custom_call.1} parent=5 // pred_region
      %s772 = ssub.s32 %s15, 2
      // Predicated region
      $region73: #{tpu_custom_call.1} parent=71 // pred_check
        %p773 = pneg %p289
      $region74: #{tpu_custom_call.1} parent=71 // pred_check_branch
        %775 = sbr.rel (%p773) target = $region76
      $region75: #{tpu_custom_call.1} parent=71 // pred_region
        %p776 = scmp.lt.s32.totalorder %s26, 1
        %s777 = scalar_select %p776, %s26, 1
        %s778 = scalar_lea.vmem %s9, %s777
      $region76: #{tpu_custom_call.1} parent=71 // pred_fallthru
        _
    $region72: #{tpu_custom_call.1} parent=5 // pred_fallthru
      _
  $region6: #{tpu_custom_call.1} parent=0 // loop_footer
    %s19 = sadd.s32 1, %s15
  $region7: #{tpu_custom_call.1} parent=0 // loop_footer_branch
    %14 = sbr.rel target = $region3
  $region8: #{tpu_custom_call.1} parent=0 // loop_exit
    _

// kernel: tpu_custom_call.1
$region0: #{tpu_custom_call.1}
  #allocation0 [shape = 'u32[]', space=smem, size = 0x4, offset = 0x4, fixed_abs, tag = 'smem constant byte address 0x4 - core index']
  #allocation1 [shape = 'u32[144,128]{1,0:T(1,128)}', space=vmem, size = 0x12000, scoped, tag = 'internal scratch']
  #allocation2 [shape = 'bf16[16,64]{1,0:T(8,128)(2,1)}', space=vmem, size = 0x1000, scoped, tag = 'scratch operand']
  #allocation3 [shape = 'f32[8,32]{1,0:T(8,128)}', space=vmem, size = 0x1000, scoped, tag = 'scratch operand']
  %s0 = inlined_call_operand.vmem [shape: bf16[16,16], index: 0, kind: input, shape index: {}]
  %s1 = inlined_call_operand.vmem [shape: bf16[2,24,8], index: 1, kind: input, shape index: {}]
  %s2 = inlined_call_operand.vmem [shape: s32[2,24,2], index: 2, kind: input, shape index: {}]
  %s3 = inlined_call_operand.vmem [shape: bf16[2,16,64], index: 3, kind: input, shape index: {}]
  %s4 = inlined_call_operand.vmem [shape: f32[2,1,64], index: 4, kind: input, shape index: {}]
  %s5 = inlined_call_operand.vmem [shape: bf16[2,8,32], index: 5, kind: input, shape index: {}]
  %s6 = inlined_call_operand.vmem [shape: f32[2,1,32], index: 6, kind: input, shape index: {}]
  %s7 = inlined_call_operand.vmem [shape: f32[2,1,32], index: 7, kind: input, shape index: {}]
  %s8 = inlined_call_operand.vmem [shape: f32[2,1,1], index: 8, kind: input, shape index: {}]
  %s9 = inlined_call_operand.vmem [shape: f32[2,1,1], index: 9, kind: output, shape index: {}]
  %s10 = sld [smem:[#allocation0]]
  $region77: #{tpu_custom_call.1} parent=0
    _
  %s12 = ssub.s32 1, %s10
  %s13 = scalar_select 0, %s12, %s10
  loop: start=0, step=1, limit=8
  $region2: #{tpu_custom_call.1} parent=0 // loop_pre_header
    _
  $region3: #{tpu_custom_call.1} parent=0 // loop_header
    %s15 = sphi 0, %s19
    %p16 = scmp.ge.s32.totalorder %s15, 8
    %s22 = sphi 0, %s34
    %s23 = sphi 0, %s30
    %s24 = sphi 0, %s22
    %s25 = sphi 0, %s23
    %s26 = sphi 0, %s24
    %s27 = sphi 0, %s25
    %s35 = sphi 0, %s35
    %s37 = sphi 0, %s35
    %s38 = sphi 0, %s37
    %s52 = sphi 0, %s38
    %s60 = sphi 0, %s62
    %s63 = sphi 0, %s60
    %s64 = sphi 0, %s63
    %s80 = sphi 0, %s64
    %s88 = sphi 0, %s90
    %s91 = sphi 0, %s88
    %s92 = sphi 0, %s91
    %s108 = sphi 0, %s92
    %s114 = sphi 0, %s116
    %s117 = sphi 0, %s114
    %s118 = sphi 0, %s117
    %s134 = sphi 0, %s118
    %s140 = sphi 0, %s142
    %s143 = sphi 0, %s140
    %s144 = sphi 0, %s143
    %s160 = sphi 0, %s144
    %s166 = sphi 0, %s168
    %s169 = sphi 0, %s166
    %s170 = sphi 0, %s169
    %s186 = sphi 0, %s170
    %s192 = sphi 0, %s194
    %s195 = sphi 0, %s192
    %s196 = sphi 0, %s195
    %s212 = sphi 0, %s196
    %s218 = sphi 0, %s220
    %s221 = sphi 0, %s218
    %s222 = sphi 0, %s221
    %s238 = sphi 0, %s222
    %s244 = sphi 0, %s246
    %s247 = sphi 0, %s244
    %s248 = sphi 0, %s247
    %s264 = sphi 0, %s248
    %s270 = sphi 0, %s272
    %s273 = sphi 0, %s270
    %s274 = sphi 0, %s273
    %s290 = sphi 0, %s274
  $region4: #{tpu_custom_call.1} parent=0 // loop_header_branch
    %18 = sbr.rel (%p16) target = $region8
  $region5: #{tpu_custom_call.1} parent=0 // loop_body
    %s20 = ssub.s32 %s15, 1
    %s21 = ssub.s32 %s15, 2
    %s28 = sadd.s32 1, %s23
    %p29 = scmp.ge.s32.totalorder %s28, 3
    %s30 = scalar_select %p29, 0, %s28
    %s31 = sadd.s32 1, %s22
    %s32 = scalar_select %p29, %s31, %s22
    %p33 = scmp.ge.s32.totalorder %s32, 2
    %s34 = scalar_select %p33, 0, %s32
    %s36 = sadd.s32 %s35, 1
    %p39 = scmp.eq.s32.totalorder %s15, 5
    %p40 = scmp.ne.s32.totalorder %s35, %s37
    %p41 = scmp.eq.s32.totalorder %s15, 0
    %p42 = por %p40, %p41
    %p43 = scmp.ne.s32.totalorder %s35, %s37
    %p44 = scmp.eq.s32.totalorder %s20, 5
    %p45 = por %p43, %p44
    %p46 = scmp.ne.s32.totalorder %s37, %s38
    %p47 = scmp.eq.s32.totalorder %s20, 0
    %p48 = por %p46, %p47
    %p49 = scmp.ne.s32.totalorder %s37, %s38
    %p50 = scmp.eq.s32.totalorder %s21, 5
    %p51 = por %p49, %p50
    %p53 = scmp.ne.s32.totalorder %s38, %s52
    %p54 = scmp.eq.s32.totalorder %s21, 0
    %p55 = por %p53, %p54
    %s56 = ssub.s32 %s22, %s34
    %s57 = ssub.s32 %s23, %s30
    %s58 = sor.u32 %s56, %s57
    %p59 = scmp.eq.s32.totalorder %s58, 0
    %s61 = sadd.s32 %s60, 1
    %s62 = scalar_select %p59, %s60, %s61
    %p65 = pneg %p59
    %p66 = scmp.eq.s32.totalorder %s15, 5
    %p67 = por %p65, %p66
    %p68 = scmp.ne.s32.totalorder %s60, %s63
    %p69 = scmp.eq.s32.totalorder %s15, 0
    %p70 = por %p68, %p69
    %p71 = scmp.ne.s32.totalorder %s60, %s63
    %p72 = scmp.eq.s32.totalorder %s20, 5
    %p73 = por %p71, %p72
    %p74 = scmp.ne.s32.totalorder %s63, %s64
    %p75 = scmp.eq.s32.totalorder %s20, 0
    %p76 = por %p74, %p75
    %p77 = scmp.ne.s32.totalorder %s63, %s64
    %p78 = scmp.eq.s32.totalorder %s21, 5
    %p79 = por %p77, %p78
    %p81 = scmp.ne.s32.totalorder %s64, %s80
    %p82 = scmp.eq.s32.totalorder %s21, 0
    %p83 = por %p81, %p82
    %s84 = ssub.s32 %s22, %s34
    %s85 = ssub.s32 %s23, %s30
    %s86 = sor.u32 %s84, %s85
    %p87 = scmp.eq.s32.totalorder %s86, 0
    %s89 = sadd.s32 %s88, 1
    %s90 = scalar_select %p87, %s88, %s89
    %p93 = pneg %p87
    %p94 = scmp.eq.s32.totalorder %s15, 5
    %p95 = por %p93, %p94
    %p96 = scmp.ne.s32.totalorder %s88, %s91
    %p97 = scmp.eq.s32.totalorder %s15, 0
    %p98 = por %p96, %p97
    %p99 = scmp.ne.s32.totalorder %s88, %s91
    %p100 = scmp.eq.s32.totalorder %s20, 5
    %p101 = por %p99, %p100
    %p102 = scmp.ne.s32.totalorder %s91, %s92
    %p103 = scmp.eq.s32.totalorder %s20, 0
    %p104 = por %p102, %p103
    %p105 = scmp.ne.s32.totalorder %s91, %s92
    %p106 = scmp.eq.s32.totalorder %s21, 5
    %p107 = por %p105, %p106
    %p109 = scmp.ne.s32.totalorder %s92, %s108
    %p110 = scmp.eq.s32.totalorder %s21, 0
    %p111 = por %p109, %p110
    %s112 = ssub.s32 %s22, %s34
    %p113 = scmp.eq.s32.totalorder %s112, 0
    %s115 = sadd.s32 %s114, 1
    %s116 = scalar_select %p113, %s114, %s115
    %p119 = pneg %p113
    %p120 = scmp.eq.s32.totalorder %s15, 5
    %p121 = por %p119, %p120
    %p122 = scmp.ne.s32.totalorder %s114, %s117
    %p123 = scmp.eq.s32.totalorder %s15, 0
    %p124 = por %p122, %p123
    %p125 = scmp.ne.s32.totalorder %s114, %s117
    %p126 = scmp.eq.s32.totalorder %s20, 5
    %p127 = por %p125, %p126
    %p128 = scmp.ne.s32.totalorder %s117, %s118
    %p129 = scmp.eq.s32.totalorder %s20, 0
    %p130 = por %p128, %p129
    %p131 = scmp.ne.s32.totalorder %s117, %s118
    %p132 = scmp.eq.s32.totalorder %s21, 5
    %p133 = por %p131, %p132
    %p135 = scmp.ne.s32.totalorder %s118, %s134
    %p136 = scmp.eq.s32.totalorder %s21, 0
    %p137 = por %p135, %p136
    %s138 = ssub.s32 %s22, %s34
    %p139 = scmp.eq.s32.totalorder %s138, 0
    %s141 = sadd.s32 %s140, 1
    %s142 = scalar_select %p139, %s140, %s141
    %p145 = pneg %p139
    %p146 = scmp.eq.s32.totalorder %s15, 5
    %p147 = por %p145, %p146
    %p148 = scmp.ne.s32.totalorder %s140, %s143
    %p149 = scmp.eq.s32.totalorder %s15, 0
    %p150 = por %p148, %p149
    %p151 = scmp.ne.s32.totalorder %s140, %s143
    %p152 = scmp.eq.s32.totalorder %s20, 5
    %p153 = por %p151, %p152
    %p154 = scmp.ne.s32.totalorder %s143, %s144
    %p155 = scmp.eq.s32.totalorder %s20, 0
    %p156 = por %p154, %p155
    %p157 = scmp.ne.s32.totalorder %s143, %s144
    %p158 = scmp.eq.s32.totalorder %s21, 5
    %p159 = por %p157, %p158
    %p161 = scmp.ne.s32.totalorder %s144, %s160
    %p162 = scmp.eq.s32.totalorder %s21, 0
    %p163 = por %p161, %p162
    %s164 = ssub.s32 %s22, %s34
    %p165 = scmp.eq.s32.totalorder %s164, 0
    %s167 = sadd.s32 %s166, 1
    %s168 = scalar_select %p165, %s166, %s167
    %p171 = pneg %p165
    %p172 = scmp.eq.s32.totalorder %s15, 5
    %p173 = por %p171, %p172
    %p174 = scmp.ne.s32.totalorder %s166, %s169
    %p175 = scmp.eq.s32.totalorder %s15, 0
    %p176 = por %p174, %p175
    %p177 = scmp.ne.s32.totalorder %s166, %s169
    %p178 = scmp.eq.s32.totalorder %s20, 5
    %p179 = por %p177, %p178
    %p180 = scmp.ne.s32.totalorder %s169, %s170
    %p181 = scmp.eq.s32.totalorder %s20, 0
    %p182 = por %p180, %p181
    %p183 = scmp.ne.s32.totalorder %s169, %s170
    %p184 = scmp.eq.s32.totalorder %s21, 5
    %p185 = por %p183, %p184
    %p187 = scmp.ne.s32.totalorder %s170, %s186
    %p188 = scmp.eq.s32.totalorder %s21, 0
    %p189 = por %p187, %p188
    %s190 = ssub.s32 %s22, %s34
    %p191 = scmp.eq.s32.totalorder %s190, 0
    %s193 = sadd.s32 %s192, 1
    %s194 = scalar_select %p191, %s192, %s193
    %p197 = pneg %p191
    %p198 = scmp.eq.s32.totalorder %s15, 5
    %p199 = por %p197, %p198
    %p200 = scmp.ne.s32.totalorder %s192, %s195
    %p201 = scmp.eq.s32.totalorder %s15, 0
    %p202 = por %p200, %p201
    %p203 = scmp.ne.s32.totalorder %s192, %s195
    %p204 = scmp.eq.s32.totalorder %s20, 5
    %p205 = por %p203, %p204
    %p206 = scmp.ne.s32.totalorder %s195, %s196
    %p207 = scmp.eq.s32.totalorder %s20, 0
    %p208 = por %p206, %p207
    %p209 = scmp.ne.s32.totalorder %s195, %s196
    %p210 = scmp.eq.s32.totalorder %s21, 5
    %p211 = por %p209, %p210
    %p213 = scmp.ne.s32.totalorder %s196, %s212
    %p214 = scmp.eq.s32.totalorder %s21, 0
    %p215 = por %p213, %p214
    %s216 = ssub.s32 %s22, %s34
    %p217 = scmp.eq.s32.totalorder %s216, 0
    %s219 = sadd.s32 %s218, 1
    %s220 = scalar_select %p217, %s218, %s219
    %p223 = pneg %p217
    %p224 = scmp.eq.s32.totalorder %s15, 5
    %p225 = por %p223, %p224
    %p226 = scmp.ne.s32.totalorder %s218, %s221
    %p227 = scmp.eq.s32.totalorder %s15, 0
    %p228 = por %p226, %p227
    %p229 = scmp.ne.s32.totalorder %s218, %s221
    %p230 = scmp.eq.s32.totalorder %s20, 5
    %p231 = por %p229, %p230
    %p232 = scmp.ne.s32.totalorder %s221, %s222
    %p233 = scmp.eq.s32.totalorder %s20, 0
    %p234 = por %p232, %p233
    %p235 = scmp.ne.s32.totalorder %s221, %s222
    %p236 = scmp.eq.s32.totalorder %s21, 5
    %p237 = por %p235, %p236
    %p239 = scmp.ne.s32.totalorder %s222, %s238
    %p240 = scmp.eq.s32.totalorder %s21, 0
    %p241 = por %p239, %p240
    %s242 = ssub.s32 %s22, %s34
    %p243 = scmp.eq.s32.totalorder %s242, 0
    %s245 = sadd.s32 %s244, 1
    %s246 = scalar_select %p243, %s244, %s245
    %p249 = pneg %p243
    %p250 = scmp.eq.s32.totalorder %s15, 5
    %p251 = por %p249, %p250
    %p252 = scmp.ne.s32.totalorder %s244, %s247
    %p253 = scmp.eq.s32.totalorder %s15, 0
    %p254 = por %p252, %p253
    %p255 = scmp.ne.s32.totalorder %s244, %s247
    %p256 = scmp.eq.s32.totalorder %s20, 5
    %p257 = por %p255, %p256
    %p258 = scmp.ne.s32.totalorder %s247, %s248
    %p259 = scmp.eq.s32.totalorder %s20, 0
    %p260 = por %p258, %p259
    %p261 = scmp.ne.s32.totalorder %s247, %s248
    %p262 = scmp.eq.s32.totalorder %s21, 5
    %p263 = por %p261, %p262
    %p265 = scmp.ne.s32.totalorder %s248, %s264
    %p266 = scmp.eq.s32.totalorder %s21, 0
    %p267 = por %p265, %p266
    %s268 = ssub.s32 %s22, %s34
    %p269 = scmp.eq.s32.totalorder %s268, 0
    %s271 = sadd.s32 %s270, 1
    %s272 = scalar_select %p269, %s270, %s271
    %p275 = pneg %p269
    %p276 = scmp.eq.s32.totalorder %s15, 5
    %p277 = por %p275, %p276
    %p278 = scmp.ne.s32.totalorder %s270, %s273
    %p279 = scmp.eq.s32.totalorder %s15, 0
    %p280 = por %p278, %p279
    %p281 = scmp.ne.s32.totalorder %s270, %s273
    %p282 = scmp.eq.s32.totalorder %s20, 5
    %p283 = por %p281, %p282
    %p284 = scmp.ne.s32.totalorder %s273, %s274
    %p285 = scmp.eq.s32.totalorder %s20, 0
    %p286 = por %p284, %p285
    %p287 = scmp.ne.s32.totalorder %s273, %s274
    %p288 = scmp.eq.s32.totalorder %s21, 5
    %p289 = por %p287, %p288
    %p291 = scmp.ne.s32.totalorder %s274, %s290
    %p292 = scmp.eq.s32.totalorder %s21, 0
    %p293 = por %p291, %p292
    %p294 = scmp.le.s32.totalorder 1, %s15
    %p295 = scmp.lt.s32.totalorder %s15, 7
    %p296 = pnand %p294, %p295
    %p297 = pneg %p296
    // Predicated region
    $region9: #{tpu_custom_call.1} parent=5 // pred_check
      _
    $region10: #{tpu_custom_call.1} parent=5 // pred_check_branch
      %299 = sbr.rel (%p296) target = $region12
    $region11: #{tpu_custom_call.1} parent=5 // pred_region
      %s300 = ssub.s32 %s15, 1
      // Predicated region
      $region13: #{tpu_custom_call.1} parent=11 // pred_check
        %p301 = pneg %p48
      $region14: #{tpu_custom_call.1} parent=11 // pred_check_branch
        %303 = sbr.rel (%p301) target = $region16
      $region15: #{tpu_custom_call.1} parent=11 // pred_region
        _
      $region16: #{tpu_custom_call.1} parent=11 // pred_fallthru
        _
    $region12: #{tpu_custom_call.1} parent=5 // pred_fallthru
      _
    %p304 = scmp.lt.s32.totalorder %s15, 6
    // Predicated region
    $region17: #{tpu_custom_call.1} parent=5 // pred_check
      %p305 = pneg %p304
    $region18: #{tpu_custom_call.1} parent=5 // pred_check_branch
      %307 = sbr.rel (%p305) target = $region20
    $region19: #{tpu_custom_call.1} parent=5 // pred_region
      // Predicated region
      $region21: #{tpu_custom_call.1} parent=19 // pred_check
        %p308 = pneg %p70
      $region22: #{tpu_custom_call.1} parent=19 // pred_check_branch
        %310 = sbr.rel (%p308) target = $region24
      $region23: #{tpu_custom_call.1} parent=19 // pred_region
        %p311 = scmp.lt.s32.totalorder %s22, 1
        %s312 = scalar_select %p311, %s22, 1
        %p313 = scmp.lt.s32.totalorder %s23, 2
        %s314 = scalar_select %p313, %s23, 2
        %s315 = smul.addr %s312, 3
        %s316 = sadd.s32 %s314, %s315
        %s317 = smul.addr %s316, 4
        %s318 = scalar_lea.vmem %s1, %s317
      $region24: #{tpu_custom_call.1} parent=19 // pred_fallthru
        _
      // Predicated region
      $region25: #{tpu_custom_call.1} parent=19 // pred_check
        %p319 = pneg %p98
      $region26: #{tpu_custom_call.1} parent=19 // pred_check_branch
        %321 = sbr.rel (%p319) target = $region28
      $region27: #{tpu_custom_call.1} parent=19 // pred_region
        %p322 = scmp.lt.s32.totalorder %s22, 1
        %s323 = scalar_select %p322, %s22, 1
        %p324 = scmp.lt.s32.totalorder %s23, 2
        %s325 = scalar_select %p324, %s23, 2
        %s326 = smul.addr %s323, 3
        %s327 = sadd.s32 %s325, %s326
        %s328 = smul.addr %s327, 8
        %s329 = scalar_lea.vmem %s2, %s328
      $region28: #{tpu_custom_call.1} parent=19 // pred_fallthru
        _
      // Predicated region
      $region29: #{tpu_custom_call.1} parent=19 // pred_check
        %p330 = pneg %p124
      $region30: #{tpu_custom_call.1} parent=19 // pred_check_branch
        %332 = sbr.rel (%p330) target = $region32
      $region31: #{tpu_custom_call.1} parent=19 // pred_region
        %p333 = scmp.lt.s32.totalorder %s22, 1
        %s334 = scalar_select %p333, %s22, 1
        %s335 = smul.addr %s334, 2
        %s336 = smul.addr %s335, 4
        %s337 = scalar_lea.vmem %s3, %s336
      $region32: #{tpu_custom_call.1} parent=19 // pred_fallthru
        _
      // Predicated region
      $region33: #{tpu_custom_call.1} parent=19 // pred_check
        %p338 = pneg %p150
      $region34: #{tpu_custom_call.1} parent=19 // pred_check_branch
        %340 = sbr.rel (%p338) target = $region36
      $region35: #{tpu_custom_call.1} parent=19 // pred_region
        %p341 = scmp.lt.s32.totalorder %s22, 1
        %s342 = scalar_select %p341, %s22, 1
        %s343 = scalar_lea.vmem %s4, %s342
      $region36: #{tpu_custom_call.1} parent=19 // pred_fallthru
        _
      // Predicated region
      $region37: #{tpu_custom_call.1} parent=19 // pred_check
        %p344 = pneg %p176
      $region38: #{tpu_custom_call.1} parent=19 // pred_check_branch
        %346 = sbr.rel (%p344) target = $region40
      $region39: #{tpu_custom_call.1} parent=19 // pred_region
        %p347 = scmp.lt.s32.totalorder %s22, 1
        %s348 = scalar_select %p347, %s22, 1
        %s349 = smul.addr %s348, 4
        %s350 = scalar_lea.vmem %s5, %s349
      $region40: #{tpu_custom_call.1} parent=19 // pred_fallthru
        _
      // Predicated region
      $region41: #{tpu_custom_call.1} parent=19 // pred_check
        %p351 = pneg %p202
      $region42: #{tpu_custom_call.1} parent=19 // pred_check_branch
        %353 = sbr.rel (%p351) target = $region44
      $region43: #{tpu_custom_call.1} parent=19 // pred_region
        %p354 = scmp.lt.s32.totalorder %s22, 1
        %s355 = scalar_select %p354, %s22, 1
        %s356 = scalar_lea.vmem %s6, %s355
      $region44: #{tpu_custom_call.1} parent=19 // pred_fallthru
        _
      // Predicated region
      $region45: #{tpu_custom_call.1} parent=19 // pred_check
        %p357 = pneg %p228
      $region46: #{tpu_custom_call.1} parent=19 // pred_check_branch
        %359 = sbr.rel (%p357) target = $region48
      $region47: #{tpu_custom_call.1} parent=19 // pred_region
        %p360 = scmp.lt.s32.totalorder %s22, 1
        %s361 = scalar_select %p360, %s22, 1
        %s362 = scalar_lea.vmem %s7, %s361
      $region48: #{tpu_custom_call.1} parent=19 // pred_fallthru
        _
      // Predicated region
      $region49: #{tpu_custom_call.1} parent=19 // pred_check
        %p363 = pneg %p254
      $region50: #{tpu_custom_call.1} parent=19 // pred_check_branch
        %365 = sbr.rel (%p363) target = $region52
      $region51: #{tpu_custom_call.1} parent=19 // pred_region
        %p366 = scmp.lt.s32.totalorder %s22, 1
        %s367 = scalar_select %p366, %s22, 1
        %s368 = scalar_lea.vmem %s8, %s367
      $region52: #{tpu_custom_call.1} parent=19 // pred_fallthru
        _
    $region20: #{tpu_custom_call.1} parent=5 // pred_fallthru
      _
    %p369 = scmp.le.s32.totalorder 1, %s15
    %p370 = scmp.lt.s32.totalorder %s15, 7
    %p371 = pnand %p369, %p370
    %p372 = pneg %p371
    // Predicated region
    $region53: #{tpu_custom_call.1} parent=5 // pred_check
      _
    $region54: #{tpu_custom_call.1} parent=5 // pred_check_branch
      %374 = sbr.rel (%p371) target = $region56
    $region55: #{tpu_custom_call.1} parent=5 // pred_region
      %s375 = ssub.s32 %s15, 1
      %p376 = pneg %p48
      %p377 = pneg %p45
      %p378 = scmp.lt.s32.totalorder %s24, 1
      %s379 = scalar_select %p378, %s24, 1
      %p380 = scmp.lt.s32.totalorder %s25, 2
      %s381 = scalar_select %p380, %s25, 2
      %s382 = smul.addr %s379, 3
      %s383 = sadd.s32 %s381, %s382
      %s384 = smul.addr %s383, 4
      %s385 = scalar_lea.vmem %s1, %s384
      %p386 = pneg %p76
      %p387 = pneg %p73
      %p388 = scmp.lt.s32.totalorder %s24, 1
      %s389 = scalar_select %p388, %s24, 1
      %p390 = scmp.lt.s32.totalorder %s25, 2
      %s391 = scalar_select %p390, %s25, 2
      %s392 = smul.addr %s389, 3
      %s393 = sadd.s32 %s391, %s392
      %s394 = smul.addr %s393, 8
      %s395 = scalar_lea.vmem %s2, %s394
      %p396 = pneg %p104
      %p397 = pneg %p101
      %p398 = scmp.lt.s32.totalorder %s24, 1
      %s399 = scalar_select %p398, %s24, 1
      %s400 = smul.addr %s399, 2
      %s401 = smul.addr %s400, 4
      %s402 = scalar_lea.vmem %s3, %s401
      %p403 = pneg %p130
      %p404 = pneg %p127
      %p405 = scmp.lt.s32.totalorder %s24, 1
      %s406 = scalar_select %p405, %s24, 1
      %s407 = scalar_lea.vmem %s4, %s406
      %p408 = pneg %p156
      %p409 = pneg %p153
      %p410 = scmp.lt.s32.totalorder %s24, 1
      %s411 = scalar_select %p410, %s24, 1
      %s412 = smul.addr %s411, 4
      %s413 = scalar_lea.vmem %s5, %s412
      %p414 = pneg %p182
      %p415 = pneg %p179
      %p416 = scmp.lt.s32.totalorder %s24, 1
      %s417 = scalar_select %p416, %s24, 1
      %s418 = scalar_lea.vmem %s6, %s417
      %p419 = pneg %p208
      %p420 = pneg %p205
      %p421 = scmp.lt.s32.totalorder %s24, 1
      %s422 = scalar_select %p421, %s24, 1
      %s423 = scalar_lea.vmem %s7, %s422
      %p424 = pneg %p234
      %p425 = pneg %p231
      %p426 = scmp.lt.s32.totalorder %s24, 1
      %s427 = scalar_select %p426, %s24, 1
      %s428 = scalar_lea.vmem %s8, %s427
      %p429 = pneg %p260
      %p430 = pneg %p257
      %p431 = pneg %p286
      %p432 = pneg %p283
      %p433 = scmp.lt.s32.totalorder %s24, 1
      %s434 = scalar_select %p433, %s24, 1
      %s435 = scalar_lea.vmem %s9, %s434
      %p436 = scmp.lt.s32.totalorder %s24, 1
      %s437 = scalar_select %p436, %s24, 1
      %p438 = scmp.lt.s32.totalorder %s25, 2
      %s439 = scalar_select %p438, %s25, 2
      %s440 = smul.addr %s437, 3
      %s441 = sadd.s32 %s439, %s440
      %s442 = smul.addr %s441, 4
      %s443 = scalar_lea.vmem %s1, %s442
      %p444 = scmp.lt.s32.totalorder %s24, 1
      %s445 = scalar_select %p444, %s24, 1
      %p446 = scmp.lt.s32.totalorder %s25, 2
      %s447 = scalar_select %p446, %s25, 2
      %s448 = smul.addr %s445, 3
      %s449 = sadd.s32 %s447, %s448
      %s450 = smul.addr %s449, 8
      %s451 = scalar_lea.vmem %s2, %s450
      %p452 = scmp.lt.s32.totalorder %s24, 1
      %s453 = scalar_select %p452, %s24, 1
      %s454 = smul.addr %s453, 2
      %s455 = smul.addr %s454, 4
      %s456 = scalar_lea.vmem %s3, %s455
      %p457 = scmp.lt.s32.totalorder %s24, 1
      %s458 = scalar_select %p457, %s24, 1
      %s459 = scalar_lea.vmem %s4, %s458
      %p460 = scmp.lt.s32.totalorder %s24, 1
      %s461 = scalar_select %p460, %s24, 1
      %s462 = smul.addr %s461, 4
      %s463 = scalar_lea.vmem %s5, %s462
      %p464 = scmp.lt.s32.totalorder %s24, 1
      %s465 = scalar_select %p464, %s24, 1
      %s466 = scalar_lea.vmem %s6, %s465
      %p467 = scmp.lt.s32.totalorder %s24, 1
      %s468 = scalar_select %p467, %s24, 1
      %s469 = scalar_lea.vmem %s7, %s468
      %p470 = scmp.lt.s32.totalorder %s24, 1
      %s471 = scalar_select %p470, %s24, 1
      %s472 = scalar_lea.vmem %s8, %s471
      %p473 = scmp.lt.s32.totalorder %s24, 1
      %s474 = scalar_select %p473, %s24, 1
      %s475 = scalar_lea.vmem %s9, %s474
      %p477 = scmp.eq.s32.totalorder %s25, 0
      // Predicated region
      $region57: #{tpu_custom_call.1} parent=55 // pred_check
        %p478 = pneg %p477
      $region58: #{tpu_custom_call.1} parent=55 // pred_check_branch
        %480 = sbr.rel (%p478) target = $region60
      $region59: #{tpu_custom_call.1} parent=55 // pred_region
        %v481 = vld [vmem:[%s0] sm:$0xf]
        %v482 = vld [vmem:[%s0 + $0x4] sm:$0xf]
        %v483 = vld [vmem:[%s456] sm:$0xf]
        %v484 = vld [vmem:[%s456 + $0x4] sm:$0xf]
        %v485 = vld [vmem:[%s459] sm:$0x1]
        %v487 = vlaneseq
        %v488 = vshrl.u32 %v487, 7
        %v489 = vsub.s32 0, %v488
        %v490 = vrot.slane %v485, %v489
        %v494 = vunpack.c.l.b16 %v481
        %v495 = vunpack.c.l.b16 %v482
        %v496 = vpack.c.b16 %v495, %v494
        %v499 = vunpack.c.l.b16 %v483
        %v500 = vunpack.c.l.b16 %v484
        %v501 = vpack.c.b16 %v500, %v499
        %vm503 = vcmask 130048
        %v505 = vsel %vm503, %v496, 0
        %507 = vmatprep.subr.bf16.mxu0 0
        %508 = vmatpush1.bf16.msra.mxu0 0
        %509 = vmatprep.subr.bf16.mxu0 0
        %510 = vmatpush1.bf16.msra.mxu0 0
        %511 = vmatprep.subr.bf16.mxu0 0
        %512 = vmatpush1.bf16.msra.mxu0 0
        %513 = vmatprep.subr.bf16.mxu0 0
        %514 = vmatpush1.bf16.msra.mxu0 0
        %515 = vmatprep.subr.bf16.mxu0 0
        %516 = vmatpush1.bf16.msra.mxu0 0
        %517 = vmatprep.subr.bf16.mxu0 0
        %518 = vmatpush1.bf16.msra.mxu0 0
        %519 = vmatprep.subr.bf16.mxu0 0
        %520 = vmatpush1.bf16.msra.mxu0 0
        %521 = vmatprep.subr.bf16.mxu0 0
        %522 = vmatpush1.bf16.msra.mxu0 %v501
        %523 = vmatprep.subr.bf16.mxu0 0
        %524 = vmatpush2.bf16.msra.mxu0 0
        %525 = vmatprep.subr.bf16.mxu0 0
        %526 = vmatpush2.bf16.msra.mxu0 0
        %527 = vmatprep.subr.bf16.mxu0 0
        %528 = vmatpush2.bf16.msra.mxu0 0
        %529 = vmatprep.subr.bf16.mxu0 0
        %530 = vmatpush2.bf16.msra.mxu0 0
        %531 = vmatprep.subr.bf16.mxu0 0
        %532 = vmatpush2.bf16.msra.mxu0 0
        %533 = vmatprep.subr.bf16.mxu0 0
        %534 = vmatpush2.bf16.msra.mxu0 0
        %535 = vmatprep.subr.bf16.mxu0 0
        %536 = vmatpush2.bf16.msra.mxu0 0
        %537 = vmatprep.subr.bf16.mxu0 0
        %538 = vmatpush2.bf16.msra.mxu0 0
        %539 = vmatprep.mubr.bf16.mxu0 0
        %540 = vmatmul.mubr.bf16.gmra.mxu0 %v505
        %v541 = vpop.f32.mrf.mxu0
        %v542 = vadd.f32 %v490, %v541
        %v543 = vpop.f32.mrf.mxu0
        %v544 = vpop.f32.mrf.mxu0
        %v545 = vadd.f32 %v490, %v544
        %v546 = vpop.f32.mrf.mxu0
        %547 = vdwg.mxu0
        %v548 = vpack.c.bf16 %v545, %v542
        %v550 = vunpack.c.l.b16 %v548
        %v551 = vunpack.c.h.b16 %v548
        %v552 = vpack.c.b16 %v550, %v550
        %v553 = vpack.c.b16 %v551, %v551
        %vm556 = vcmask 519168
        %557 = vst.msk [vmem:[#allocation2] sm:$0xf] %vm556, %v552
        %558 = vst.msk [vmem:[#allocation2 + $0x4] sm:$0xf] %vm556, %v553
        %vm559 = vcmask 261120
        %560 = vst.msk [vmem:[#allocation3] sm:$0xff] %vm559, 0.0
      $region60: #{tpu_custom_call.1} parent=55 // pred_fallthru
        _
      %v561 = vld [vmem:[%s443] sm:$0xf]
      %v562 = vld [vmem:[%s463] sm:$0xf]
      %v563 = vld [vmem:[%s466] sm:$0x1]
      %v565 = vlaneseq
      %v566 = vshrl.u32 %v565, 7
      %v567 = vsub.s32 0, %v566
      %v568 = vrot.slane %v563, %v567
      %vm570 = vcmask 64512
      %v572 = vsel %vm570, %v561, 0
      %vm574 = vcmask 1043456
      %v576 = vsel %vm574, %v562, 0
      %578 = vmatprep.subr.bf16.mxu0 0
      %579 = vmatpush1.bf16.msra.mxu0 0
      %580 = vmatprep.subr.bf16.mxu0 0
      %581 = vmatpush1.bf16.msra.mxu0 0
      %582 = vmatprep.subr.bf16.mxu0 0
      %583 = vmatpush1.bf16.msra.mxu0 0
      %584 = vmatprep.subr.bf16.mxu0 0
      %585 = vmatpush1.bf16.msra.mxu0 0
      %586 = vmatprep.subr.bf16.mxu0 0
      %587 = vmatpush1.bf16.msra.mxu0 0
      %588 = vmatprep.subr.bf16.mxu0 0
      %589 = vmatpush1.bf16.msra.mxu0 0
      %590 = vmatprep.subr.bf16.mxu0 0
      %591 = vmatpush1.bf16.msra.mxu0 0
      %592 = vmatprep.subr.bf16.mxu0 0
      %593 = vmatpush1.bf16.msra.mxu0 %v576
      %594 = vmatprep.subr.bf16.mxu0 0
      %595 = vmatpush2.bf16.msra.mxu0 0
      %596 = vmatprep.subr.bf16.mxu0 0
      %597 = vmatpush2.bf16.msra.mxu0 0
      %598 = vmatprep.subr.bf16.mxu0 0
      %599 = vmatpush2.bf16.msra.mxu0 0
      %600 = vmatprep.subr.bf16.mxu0 0
      %601 = vmatpush2.bf16.msra.mxu0 0
      %602 = vmatprep.subr.bf16.mxu0 0
      %603 = vmatpush2.bf16.msra.mxu0 0
      %604 = vmatprep.subr.bf16.mxu0 0
      %605 = vmatpush2.bf16.msra.mxu0 0
      %606 = vmatprep.subr.bf16.mxu0 0
      %607 = vmatpush2.bf16.msra.mxu0 0
      %608 = vmatprep.subr.bf16.mxu0 0
      %609 = vmatpush2.bf16.msra.mxu0 0
      %610 = vmatprep.mubr.bf16.mxu0 0
      %611 = vmatmul.mubr.bf16.gmra.mxu0 %v572
      %v612 = vpop.f32.mrf.mxu0
      %v613 = vadd.f32 %v568, %v612
      %v614 = vpop.f32.mrf.mxu0
      %v615 = vpop.f32.mrf.mxu0
      %v616 = vpop.f32.mrf.mxu0
      %617 = vdwg.mxu0
      %v618 = vld [vmem:[%s451] sm:$0xff]
      %v619 = vlaneseq
      %v620 = vand.u32 %v619, 127
      %621 = vset.pattern.permute.xlu0 0
      %622 = vperm.xlu0 %621, %v618
      %v623 = vpop.permute.xlu0 %622
      %vm624 = vcmp.eq.s32.totalorder %v623, %v620
      %v625 = vsel %vm624, 1, 0
      %v626 = vcvt.s32.f32 %v625
      %v627 = vpack.c.bf16 %v626, %v626
      %628 = vset.pattern.permute.xlu0 1
      %629 = vperm.xlu0 %628, %v618
      %v630 = vpop.permute.xlu0 %629
      %vm631 = vcmp.eq.s32.totalorder %v630, %v620
      %v632 = vsel %vm631, 1, 0
      %v633 = vcvt.s32.f32 %v632
      %v634 = vpack.c.bf16 %v633, %v633
      %v635 = vld [vmem:[#allocation2] sm:$0xf]
      %v636 = vld [vmem:[#allocation2 + $0x4] sm:$0xf]
      %v639 = vunpack.c.l.b16 %v635
      %v640 = vunpack.c.l.b16 %v636
      %v641 = vpack.c.b16 %v640, %v639
      %vm643 = vcmask 130048
      %v645 = vsel %vm643, %v627, 0
      %647 = vmatprep.subr.bf16.mxu0 0
      %648 = vmatpush1.bf16.msra.mxu0 0
      %649 = vmatprep.subr.bf16.mxu0 0
      %650 = vmatpush1.bf16.msra.mxu0 0
      %651 = vmatprep.subr.bf16.mxu0 0
      %652 = vmatpush1.bf16.msra.mxu0 0
      %653 = vmatprep.subr.bf16.mxu0 0
      %654 = vmatpush1.bf16.msra.mxu0 0
      %655 = vmatprep.subr.bf16.mxu0 0
      %656 = vmatpush1.bf16.msra.mxu0 0
      %657 = vmatprep.subr.bf16.mxu0 0
      %658 = vmatpush1.bf16.msra.mxu0 0
      %659 = vmatprep.subr.bf16.mxu0 0
      %660 = vmatpush1.bf16.msra.mxu0 0
      %661 = vmatprep.subr.bf16.mxu0 0
      %662 = vmatpush1.bf16.msra.mxu0 %v641
      %663 = vmatprep.subr.bf16.mxu0 0
      %664 = vmatpush2.bf16.msra.mxu0 0
      %665 = vmatprep.subr.bf16.mxu0 0
      %666 = vmatpush2.bf16.msra.mxu0 0
      %667 = vmatprep.subr.bf16.mxu0 0
      %668 = vmatpush2.bf16.msra.mxu0 0
      %669 = vmatprep.subr.bf16.mxu0 0
      %670 = vmatpush2.bf16.msra.mxu0 0
      %671 = vmatprep.subr.bf16.mxu0 0
      %672 = vmatpush2.bf16.msra.mxu0 0
      %673 = vmatprep.subr.bf16.mxu0 0
      %674 = vmatpush2.bf16.msra.mxu0 0
      %675 = vmatprep.subr.bf16.mxu0 0
      %676 = vmatpush2.bf16.msra.mxu0 0
      %677 = vmatprep.subr.bf16.mxu0 0
      %678 = vmatpush2.bf16.msra.mxu0 0
      %679 = vmatprep.mubr.bf16.mxu0 0
      %680 = vmatmul.mubr.bf16.gmra.mxu0 %v645
      %v681 = vpop.f32.mrf.mxu0
      %v682 = vadd.f32 0.0, %v681
      %v683 = vpop.f32.mrf.mxu0
      %v684 = vpop.f32.mrf.mxu0
      %v685 = vpop.f32.mrf.mxu0
      %686 = vdwg.mxu0
      %687 = vrot.lane.b32.xlu0 %v641, 96
      %v688 = vpop.permute.xlu0 %687
      %v691 = vsel %vm643, %v634, 0
      %693 = vmatprep.subr.bf16.mxu0 0
      %694 = vmatpush1.bf16.msra.mxu0 0
      %695 = vmatprep.subr.bf16.mxu0 0
      %696 = vmatpush1.bf16.msra.mxu0 0
      %697 = vmatprep.subr.bf16.mxu0 0
      %698 = vmatpush1.bf16.msra.mxu0 0
      %699 = vmatprep.subr.bf16.mxu0 0
      %700 = vmatpush1.bf16.msra.mxu0 0
      %701 = vmatprep.subr.bf16.mxu0 0
      %702 = vmatpush1.bf16.msra.mxu0 0
      %703 = vmatprep.subr.bf16.mxu0 0
      %704 = vmatpush1.bf16.msra.mxu0 0
      %705 = vmatprep.subr.bf16.mxu0 0
      %706 = vmatpush1.bf16.msra.mxu0 0
      %707 = vmatprep.subr.bf16.mxu0 0
      %708 = vmatpush1.bf16.msra.mxu0 %v688
      %709 = vmatprep.subr.bf16.mxu0 0
      %710 = vmatpush2.bf16.msra.mxu0 0
      %711 = vmatprep.subr.bf16.mxu0 0
      %712 = vmatpush2.bf16.msra.mxu0 0
      %713 = vmatprep.subr.bf16.mxu0 0
      %714 = vmatpush2.bf16.msra.mxu0 0
      %715 = vmatprep.subr.bf16.mxu0 0
      %716 = vmatpush2.bf16.msra.mxu0 0
      %717 = vmatprep.subr.bf16.mxu0 0
      %718 = vmatpush2.bf16.msra.mxu0 0
      %719 = vmatprep.subr.bf16.mxu0 0
      %720 = vmatpush2.bf16.msra.mxu0 0
      %721 = vmatprep.subr.bf16.mxu0 0
      %722 = vmatpush2.bf16.msra.mxu0 0
      %723 = vmatprep.subr.bf16.mxu0 0
      %724 = vmatpush2.bf16.msra.mxu0 0
      %725 = vmatprep.mubr.bf16.mxu0 0
      %726 = vmatmul.mubr.bf16.gmra.mxu0 %v691
      %v727 = vpop.f32.mrf.mxu0
      %v728 = vadd.f32 0.0, %v727
      %v729 = vpop.f32.mrf.mxu0
      %v730 = vpop.f32.mrf.mxu0
      %v731 = vpop.f32.mrf.mxu0
      %732 = vdwg.mxu0
      %v733 = vmul.f32 %v613, %v682
      %v734 = vmul.f32 %v733, %v728
      %v735 = vld [vmem:[#allocation3] sm:$0xff]
      %v736 = vadd.f32 %v734, 0.0
      %v737 = vadd.f32 %v735, %v736
      %vm738 = vcmask 261120
      %739 = vst.msk [vmem:[#allocation3] sm:$0xff] %vm738, %v737
      %p740 = scmp.eq.s32.totalorder %s25, 2
      // Predicated region
      $region61: #{tpu_custom_call.1} parent=55 // pred_check
        %p741 = pneg %p740
      $region62: #{tpu_custom_call.1} parent=55 // pred_check_branch
        %743 = sbr.rel (%p741) target = $region64
      $region63: #{tpu_custom_call.1} parent=55 // pred_region
        %v744 = vld [vmem:[#allocation3] sm:$0xff]
        %v745 = vsel %vm738, %v744, 0.0
        %v746 = vrot.slane %v745, 4
        %v747 = vadd.f32 %v745, %v746
        %v748 = vrot.slane %v747, 2
        %v749 = vadd.f32 %v747, %v748
        %v750 = vrot.slane %v749, 1
        %v751 = vadd.f32 %v749, %v750
        %v752 = vld [vmem:[%s469] sm:$0x1]
        %v753 = vmul.f32 %v751, %v752
        %vm754 = vcmask 253952
        %v755 = vsel %vm754, %v753, 0.0
        %756 = vadd.xlane.f32.xlu0 %v755
        %v757 = vpop.xlane.xlu0 %756
        %v758 = vld [vmem:[%s472] sm:$0x1]
        %v759 = vadd.f32 %v757, %v758
        %vm760 = vcmask 0
        %761 = vst.msk [vmem:[%s475] sm:$0x1] %vm760, %v759
      $region64: #{tpu_custom_call.1} parent=55 // pred_fallthru
        _
      %p762 = scmp.lt.s32.totalorder %s24, 1
      %s763 = scalar_select %p762, %s24, 1
      %s764 = scalar_lea.vmem %s9, %s763
      // Predicated region
      $region65: #{tpu_custom_call.1} parent=55 // pred_check
        %p765 = pneg %p283
      $region66: #{tpu_custom_call.1} parent=55 // pred_check_branch
        %767 = sbr.rel (%p765) target = $region68
      $region67: #{tpu_custom_call.1} parent=55 // pred_region
        _
      $region68: #{tpu_custom_call.1} parent=55 // pred_fallthru
        _
    $region56: #{tpu_custom_call.1} parent=5 // pred_fallthru
      _
    %p768 = scmp.le.s32.totalorder 2, %s15
    // Predicated region
    $region69: #{tpu_custom_call.1} parent=5 // pred_check
      %p769 = pneg %p768
    $region70: #{tpu_custom_call.1} parent=5 // pred_check_branch
      %771 = sbr.rel (%p769) target = $region72
    $region71: #{tpu_custom_call.1} parent=5 // pred_region
      %s772 = ssub.s32 %s15, 2
      // Predicated region
      $region73: #{tpu_custom_call.1} parent=71 // pred_check
        %p773 = pneg %p289
      $region74: #{tpu_custom_call.1} parent=71 // pred_check_branch
        %775 = sbr.rel (%p773) target = $region76
      $region75: #{tpu_custom_call.1} parent=71 // pred_region
        %p776 = scmp.lt.s32.totalorder %s26, 1
        %s777 = scalar_select %p776, %s26, 1
        %s778 = scalar_lea.vmem %s9, %s777
      $region76: #{tpu_custom_call.1} parent=71 // pred_fallthru
        _
    $region72: #{tpu_custom_call.1} parent=5 // pred_fallthru
      _
  $region6: #{tpu_custom_call.1} parent=0 // loop_footer
    %s19 = sadd.s32 1, %s15
  $region7: #{tpu_custom_call.1} parent=0 // loop_footer_branch
    %14 = sbr.rel target = $region3
  $region8: #{tpu_custom_call.1} parent=0 // loop_exit
    _

</llo_original>
